<compile_context>
chip_gen: v7x
topology: tpu7x:2x2x1
jax: 0.10.0
libtpu: 0.0.40
codegen_flags: <defaults>
</compile_context>

<pallas_src>
import functools

import numpy as np
import jax
import jax.numpy as jnp
from jax.experimental import pallas as pl
from jax.experimental.pallas import tpu as pltpu


def _ceil_to(x, m):
    return ((x + m - 1) // m) * m


def _vmem_cap_bytes():
    """Scoped-VMEM cap with ~25% headroom for compiler scratch / double-buffering.

    v7x (64 MiB physical) -> ~48 MiB; v5e/v6e (128 MiB) -> ~96 MiB.  Falls back to
    the conservative v7x figure if the hardware query is unavailable.
    """
    phys = 64 * 1024 * 1024
    try:
        phys = int(pltpu.get_tpu_info().vmem_capacity_bytes)
    except Exception:
        pass
    return (phys * 3) // 4


def _vmem_limit_bytes(P, HqWq, Cin, Cout, Mq):
    """Padded-tile VMEM estimate (double-buffered blocks + in-kernel staging)."""
    x_blk = P * _ceil_to(HqWq, 16) * _ceil_to(Cin, 128) * 2        # bf16 (16,128) tiles
    w_blk = _ceil_to(27 * Cin, 16) * _ceil_to(Cout, 128) * 2
    o_blk = _ceil_to(Mq, 16) * _ceil_to(Cout, 128) * 2
    patch = _ceil_to(Mq, 16) * _ceil_to(27 * Cin, 128) * 2         # staged (Mq, 27*Cin)
    acc = _ceil_to(Mq, 8) * _ceil_to(Cout, 128) * 4                # f32 dot result
    est = 3 * 2 * x_blk + 2 * w_blk + 2 * o_blk + patch + acc
    return int(min(_vmem_cap_bytes(), max(32 * 1024 * 1024, 2 * est)))


# -----------------------------------------------------------------------------
# Fused 3x3x3 conv kernel: one grid step = one (batch, output-depth-plane).
# -----------------------------------------------------------------------------
def _make_conv_kernel(stride, Wq, Mq, Cin, Cout):
    """One output depth plane of a 3x3x3 conv as a single K=27*Cin MXU dot.

    x{0,1,2}_ref: (P, Hq*Wq, Cin) bf16 -- the three padded input depth planes used by
                                          this output plane; each plane holds all H/W
                                          stride-phases, row-major flattened over
                                          (Hq, Wq) so every tap is a contiguous slice.
    w_ref:        (27*Cin, Cout)  bf16 -- full weight, laid out (kd, kh, kw, cin).
    o_ref:        (Mq, Cout)      bf16 -- "wide-row" output plane (tail cols garbage).
    """

    def kernel(x0_ref, x1_ref, x2_ref, w_ref, o_ref):
        x_refs = (x0_ref, x1_ref, x2_ref)
        taps = []
        for kd in range(3):
            for kh in range(3):
                for kw in range(3):
                    # Which H/W phase this tap lives in, and its offset in the phase.
                    p = (kh % stride) * stride + (kw % stride)
                    start = (kh // stride) * Wq + (kw // stride)
                    taps.append(x_refs[kd][p, start:start + Mq, :])   # (Mq, Cin)
        patch = jnp.concatenate(taps, axis=-1)                        # (Mq, 27*Cin) bf16
        acc = jnp.dot(patch, w_ref[...], preferred_element_type=jnp.float32)
        o_ref[...] = acc.astype(o_ref.dtype)

    return kernel


@functools.partial(jax.jit, static_argnames=("stride", "pad"))
def conv3d_pallas(x, weight, stride, pad):
    """Dense 3x3x3 conv, stride in {1, 2}, no bias.

    x:      (B, D, H, W, Cin) NDHWC (any float dtype; cast to bf16 internally).
    weight: (27*Cin, Cout) bf16, laid out (kd, kh, kw, cin, cout).
    Returns (B, Do, Ho, Wo, Cout) bfloat16.
    """
    B, D, H, W, Cin = x.shape
    Cout = weight.shape[-1]

    x = x.astype(jnp.bfloat16)
    xp = jnp.pad(x, ((0, 0), (pad, pad), (pad, pad), (pad, pad), (0, 0)))
    Dp, Hp, Wp = D + 2 * pad, H + 2 * pad, W + 2 * pad
    Do = (Dp - 3) // stride + 1
    Ho = (Hp - 3) // stride + 1
    Wo = (Wp - 3) // stride + 1

    if stride == 1:
        P, Hq, Wq = 1, Hp, Wp
        slabs = xp.reshape(B, Dp, 1, Hp * Wp, Cin)
    else:
        # Phase-split H and W (even/odd) so each (kh, kw) tap becomes a unit-stride
        # slice of one phase. One reorganization pass; total bytes unchanged.
        Hpe, Wpe = Hp + (Hp % 2), Wp + (Wp % 2)
        xp = jnp.pad(xp, ((0, 0), (0, 0), (0, Hpe - Hp), (0, Wpe - Wp), (0, 0)))
        P, Hq, Wq = 4, Hpe // 2, Wpe // 2
        slabs = jnp.stack(
            [xp[:, :, ph::2, pw::2, :] for ph in (0, 1) for pw in (0, 1)], axis=2
        ).reshape(B, Dp, 4, Hq * Wq, Cin)                  # (B, Dp, 4, Hq*Wq, Cin)

    # "Wide-row" output length: rows are produced with the padded width Wq; the last
    # (Wq - Wo) columns of each row are wrap-around garbage and are sliced off below.
    # By construction max_tap_start + Mq <= Hq*Wq for all strides.
    Mq = (Ho - 1) * Wq + Wo

    kernel = _make_conv_kernel(stride, Wq, Mq, Cin, Cout)

    # Three views of the same array, offset by the kd tap -> kd folded into the body.
    def _x_spec(kd):
        return pl.BlockSpec(
            (None, None, P, Hq * Wq, Cin),
            lambda b, do, _kd=kd: (b, stride * do + _kd, 0, 0, 0),
        )

    w_spec = pl.BlockSpec((27 * Cin, Cout), lambda b, do: (0, 0))      # VMEM-resident
    out_spec = pl.BlockSpec((None, None, Mq, Cout), lambda b, do: (b, do, 0, 0))

    out_wide = pl.pallas_call(
        kernel,
        out_shape=jax.ShapeDtypeStruct((B, Do, Mq, Cout), jnp.bfloat16),
        grid_spec=pltpu.PrefetchScalarGridSpec(
            num_scalar_prefetch=0,
            grid=(B, Do),
            in_specs=[_x_spec(0), _x_spec(1), _x_spec(2), w_spec],
            out_specs=out_spec,
        ),
        compiler_params=pltpu.CompilerParams(
            dimension_semantics=("parallel", "parallel"),
            vmem_limit_bytes=_vmem_limit_bytes(P, Hq * Wq, Cin, Cout, Mq),
        ),
    )(slabs, slabs, slabs, weight)

    # (B, Do, Mq, Cout) wide rows -> (B, Do, Ho, Wo, Cout): pad to full Wq rows,
    # reshape, drop the garbage tail columns.
    out_wide = jnp.pad(out_wide, ((0, 0), (0, 0), (0, Ho * Wq - Mq), (0, 0)))
    out = out_wide.reshape(B, Do, Ho, Wq, Cout)[:, :, :, :Wo, :]
    return out


# -----------------------------------------------------------------------------
# Pure-JAX reference conv (for correctness checking only)
# -----------------------------------------------------------------------------
def _conv3d_ref(x_f32, w_dhwio_f32, stride, pad):
    return jax.lax.conv_general_dilated(
        x_f32,
        w_dhwio_f32,
        window_strides=(stride,) * 3,
        padding=[(pad, pad)] * 3,
        dimension_numbers=("NDHWC", "DHWIO", "NDHWC"),
    )


# -----------------------------------------------------------------------------
# CNN_3D equivalent
# -----------------------------------------------------------------------------
class CNN3DPallas:
    """Dense re-implementation of the spconv CNN_3D placeholder.

    blocks: (Cin->16, k3 s1 p0), (16->16, k3 s2 p1), (16->32, k3 s2 p1), (32->64, k3 s2 p1)
    """

    def __init__(self, C_in, grid_shape, voxel_size, grid_bounds, key):
        self.grid_shape = tuple(grid_shape)                            # (D, H, W)
        self.base_voxel_size = jnp.asarray(voxel_size, jnp.float32)    # (3,)
        self.voxel_offset = jnp.asarray(grid_bounds[:3], jnp.float32)  # (3,)
        specs = [(C_in, 16, 1, 0), (16, 16, 2, 1), (16, 32, 2, 1), (32, 64, 2, 1)]
        self.weights, self.strides, self.pads = [], [], []
        keys = jax.random.split(key, len(specs))
        for k, (cin, cout, s, p) in zip(keys, specs):
            fan_in = cin * 27
            w = jax.random.normal(k, (cout, cin, 3, 3, 3), jnp.float32) / jnp.sqrt(
                jnp.float32(fan_in)
            )
            # (Cout, Cin, kd, kh, kw) -> (kd, kh, kw, Cin, Cout) -> (27*Cin, Cout), bf16
            w = (
                jnp.transpose(w, (2, 3, 4, 1, 0))
                .reshape(27 * cin, cout)
                .astype(jnp.bfloat16)
            )
            self.weights.append(w)
            self.strides.append(s)
            self.pads.append(p)

    def densify(self, features, coordinates, batch_size):
        D, H, W = self.grid_shape
        Cin = features.shape[-1]
        dense = jnp.zeros((batch_size, D, H, W, Cin), jnp.bfloat16)
        # Duplicate coordinates resolve as last-write-wins.
        dense = dense.at[
            coordinates[:, 0], coordinates[:, 1], coordinates[:, 2], coordinates[:, 3]
        ].set(features.astype(jnp.bfloat16))
        return dense

    def _to_global(self, stride_idx, volume):
        """volume: (B, Do, Ho, Wo, C) -> (features (B*V, C) f32, xyz (B*V, 3))."""
        B, Do, Ho, Wo, C = volume.shape
        voxel_size = self.base_voxel_size * (2.0 ** stride_idx)
        di = jnp.arange(Do, dtype=jnp.float32)
        hi = jnp.arange(Ho, dtype=jnp.float32)
        wi = jnp.arange(Wo, dtype=jnp.float32)
        idx = jnp.stack(jnp.meshgrid(di, hi, wi, indexing="ij"), axis=-1)  # (Do,Ho,Wo,3)
        xyz = idx * voxel_size + self.voxel_offset
        xyz = jnp.broadcast_to(xyz[None], (B, Do, Ho, Wo, 3)).reshape(-1, 3)
        feats = volume.reshape(-1, C).astype(jnp.float32)
        return feats, xyz

    def __call__(self, features, coordinates, batch_size):
        """features: (N, Cin) f32; coordinates: (N, 4) int32 [batch, d, h, w]."""
        x = self.densify(features, coordinates, batch_size)
        vols = []
        for w, s, p in zip(self.weights, self.strides, self.pads):
            x = conv3d_pallas(x, w, stride=s, pad=p)   # bf16 NDHWC between layers
            vols.append(x)
        return [self._to_global(i, v) for i, v in enumerate(vols)]


# -----------------------------------------------------------------------------
if __name__ == "__main__":
    key = jax.random.PRNGKey(0)
    k_w, k_feat, k_coord = jax.random.split(key, 3)

    # Small synthetic problem consistent with the module's forward signature.
    batch_size = 2
    C_in = 4
    grid_shape = (10, 10, 10)  # (D, H, W); real model uses (41, 1600, 1280)-scale grids
    n_voxels = 64

    voxel_size = [0.05, 0.05, 0.1]
    grid_bounds = [0.0, -40.0, -3.0, 70.4, 40.0, 1.0]

    model = CNN3DPallas(C_in, grid_shape, voxel_size, grid_bounds, k_w)

    features = jax.random.normal(k_feat, (n_voxels, C_in), jnp.float32)
    coords_b = jax.random.randint(k_coord, (n_voxels, 1), 0, batch_size)
    coords_d = jax.random.randint(jax.random.fold_in(k_coord, 1), (n_voxels, 1), 0, grid_shape[0])
    coords_h = jax.random.randint(jax.random.fold_in(k_coord, 2), (n_voxels, 1), 0, grid_shape[1])
    coords_w = jax.random.randint(jax.random.fold_in(k_coord, 3), (n_voxels, 1), 0, grid_shape[2])
    coordinates = jnp.concatenate([coords_b, coords_d, coords_h, coords_w], axis=-1).astype(
        jnp.int32
    )

    outs = model(features, coordinates, batch_size)
    for feat, xyz in outs:
        jax.block_until_ready(feat)
        jax.block_until_ready(xyz)

    # Sanity: shapes follow 10 -> 8 -> 4 -> 2 -> 1 per spatial dim with C = 16,16,32,64.
    expected = [(2 * 8 * 8 * 8, 16), (2 * 4 * 4 * 4, 16), (2 * 2 * 2 * 2, 32), (2 * 1 * 1 * 1, 64)]
    for (feat, xyz), (nv, c) in zip(outs, expected):
        assert feat.shape == (nv, c), feat.shape
        assert xyz.shape == (nv, 3), xyz.shape

    # Numerical check against a pure-JAX dense conv chain (same bf16 quantization).
    x_ref = model.densify(features, coordinates, batch_size)
    for i, (w, s, p) in enumerate(zip(model.weights, model.strides, model.pads)):
        cin = w.shape[0] // 27
        cout = w.shape[1]
        w_dhwio = w.reshape(3, 3, 3, cin, cout).astype(jnp.float32)
        y_ref = _conv3d_ref(x_ref.astype(jnp.float32), w_dhwio, s, p)
        np.testing.assert_allclose(
            np.asarray(outs[i][0]), np.asarray(y_ref.reshape(-1, cout)),
            rtol=5e-2, atol=5e-2,
        )
        x_ref = y_ref.astype(jnp.bfloat16)

    print("KERNEL_OK")
</pallas_src>

<mosaic_0001>
module attributes {stable_mosaic.version = 11 : i64} {
  func.func @kernel(%arg0: i32, %arg1: i32, %arg2: memref<1x1x1x100x4xbf16, #tpu.memory_space<vmem>>, %arg3: memref<1x1x1x100x4xbf16, #tpu.memory_space<vmem>>, %arg4: memref<1x1x1x100x4xbf16, #tpu.memory_space<vmem>>, %arg5: memref<108x16xbf16, #tpu.memory_space<vmem>>, %arg6: memref<1x1x78x16xbf16, #tpu.memory_space<vmem>>) attributes {dimension_semantics = [#tpu.dimension_semantics<parallel>, #tpu.dimension_semantics<parallel>], iteration_bounds = array<i64: 2, 8>, scalar_prefetch = 0 : i64, scratch_operands = 0 : i64, tpu.core_type = #tpu.core_type<tc>, window_params = [{transform_indices = @transform_0, window_bounds = array<i64: 1, 1, 1, 100, 4>}, {transform_indices = @transform_1, window_bounds = array<i64: 1, 1, 1, 100, 4>}, {transform_indices = @transform_2, window_bounds = array<i64: 1, 1, 1, 100, 4>}, {pipeline_mode = #tpu.pipeline_mode<synchronous>, transform_indices = @transform_3, window_bounds = array<i64: 108, 16>}, {transform_indices = @transform_4, window_bounds = array<i64: 1, 1, 78, 16>}]} {
    %c0 = arith.constant 0 : index
    %c0_0 = arith.constant 0 : index
    %c0_1 = arith.constant 0 : index
    %c0_2 = arith.constant 0 : index
    %c0_3 = arith.constant 0 : index
    %0 = vector.load %arg2[%c0, %c0_0, %c0_1, %c0_2, %c0_3] : memref<1x1x1x100x4xbf16, #tpu.memory_space<vmem>>, vector<1x1x1x78x4xbf16>
    %1 = vector.shape_cast %0 : vector<1x1x1x78x4xbf16> to vector<78x4xbf16>
    %c0_4 = arith.constant 0 : index
    %c0_5 = arith.constant 0 : index
    %c0_6 = arith.constant 0 : index
    %c1 = arith.constant 1 : index
    %c0_7 = arith.constant 0 : index
    %2 = vector.load %arg2[%c0_4, %c0_5, %c0_6, %c1, %c0_7] : memref<1x1x1x100x4xbf16, #tpu.memory_space<vmem>>, vector<1x1x1x78x4xbf16>
    %3 = vector.shape_cast %2 : vector<1x1x1x78x4xbf16> to vector<78x4xbf16>
    %c0_8 = arith.constant 0 : index
    %c0_9 = arith.constant 0 : index
    %c0_10 = arith.constant 0 : index
    %c2 = arith.constant 2 : index
    %c0_11 = arith.constant 0 : index
    %4 = vector.load %arg2[%c0_8, %c0_9, %c0_10, %c2, %c0_11] : memref<1x1x1x100x4xbf16, #tpu.memory_space<vmem>>, vector<1x1x1x78x4xbf16>
    %5 = vector.shape_cast %4 : vector<1x1x1x78x4xbf16> to vector<78x4xbf16>
    %c0_12 = arith.constant 0 : index
    %c0_13 = arith.constant 0 : index
    %c0_14 = arith.constant 0 : index
    %c10 = arith.constant 10 : index
    %c0_15 = arith.constant 0 : index
    %6 = vector.load %arg2[%c0_12, %c0_13, %c0_14, %c10, %c0_15] : memref<1x1x1x100x4xbf16, #tpu.memory_space<vmem>>, vector<1x1x1x78x4xbf16>
    %7 = vector.shape_cast %6 : vector<1x1x1x78x4xbf16> to vector<78x4xbf16>
    %c0_16 = arith.constant 0 : index
    %c0_17 = arith.constant 0 : index
    %c0_18 = arith.constant 0 : index
    %c11 = arith.constant 11 : index
    %c0_19 = arith.constant 0 : index
    %8 = vector.load %arg2[%c0_16, %c0_17, %c0_18, %c11, %c0_19] : memref<1x1x1x100x4xbf16, #tpu.memory_space<vmem>>, vector<1x1x1x78x4xbf16>
    %9 = vector.shape_cast %8 : vector<1x1x1x78x4xbf16> to vector<78x4xbf16>
    %c0_20 = arith.constant 0 : index
    %c0_21 = arith.constant 0 : index
    %c0_22 = arith.constant 0 : index
    %c12 = arith.constant 12 : index
    %c0_23 = arith.constant 0 : index
    %10 = vector.load %arg2[%c0_20, %c0_21, %c0_22, %c12, %c0_23] : memref<1x1x1x100x4xbf16, #tpu.memory_space<vmem>>, vector<1x1x1x78x4xbf16>
    %11 = vector.shape_cast %10 : vector<1x1x1x78x4xbf16> to vector<78x4xbf16>
    %c0_24 = arith.constant 0 : index
    %c0_25 = arith.constant 0 : index
    %c0_26 = arith.constant 0 : index
    %c20 = arith.constant 20 : index
    %c0_27 = arith.constant 0 : index
    %12 = vector.load %arg2[%c0_24, %c0_25, %c0_26, %c20, %c0_27] : memref<1x1x1x100x4xbf16, #tpu.memory_space<vmem>>, vector<1x1x1x78x4xbf16>
    %13 = vector.shape_cast %12 : vector<1x1x1x78x4xbf16> to vector<78x4xbf16>
    %c0_28 = arith.constant 0 : index
    %c0_29 = arith.constant 0 : index
    %c0_30 = arith.constant 0 : index
    %c21 = arith.constant 21 : index
    %c0_31 = arith.constant 0 : index
    %14 = vector.load %arg2[%c0_28, %c0_29, %c0_30, %c21, %c0_31] : memref<1x1x1x100x4xbf16, #tpu.memory_space<vmem>>, vector<1x1x1x78x4xbf16>
    %15 = vector.shape_cast %14 : vector<1x1x1x78x4xbf16> to vector<78x4xbf16>
    %c0_32 = arith.constant 0 : index
    %c0_33 = arith.constant 0 : index
    %c0_34 = arith.constant 0 : index
    %c22 = arith.constant 22 : index
    %c0_35 = arith.constant 0 : index
    %16 = vector.load %arg2[%c0_32, %c0_33, %c0_34, %c22, %c0_35] : memref<1x1x1x100x4xbf16, #tpu.memory_space<vmem>>, vector<1x1x1x78x4xbf16>
    %17 = vector.shape_cast %16 : vector<1x1x1x78x4xbf16> to vector<78x4xbf16>
    %c0_36 = arith.constant 0 : index
    %c0_37 = arith.constant 0 : index
    %c0_38 = arith.constant 0 : index
    %c0_39 = arith.constant 0 : index
    %c0_40 = arith.constant 0 : index
    %18 = vector.load %arg3[%c0_36, %c0_37, %c0_38, %c0_39, %c0_40] : memref<1x1x1x100x4xbf16, #tpu.memory_space<vmem>>, vector<1x1x1x78x4xbf16>
    %19 = vector.shape_cast %18 : vector<1x1x1x78x4xbf16> to vector<78x4xbf16>
    %c0_41 = arith.constant 0 : index
    %c0_42 = arith.constant 0 : index
    %c0_43 = arith.constant 0 : index
    %c1_44 = arith.constant 1 : index
    %c0_45 = arith.constant 0 : index
    %20 = vector.load %arg3[%c0_41, %c0_42, %c0_43, %c1_44, %c0_45] : memref<1x1x1x100x4xbf16, #tpu.memory_space<vmem>>, vector<1x1x1x78x4xbf16>
    %21 = vector.shape_cast %20 : vector<1x1x1x78x4xbf16> to vector<78x4xbf16>
    %c0_46 = arith.constant 0 : index
    %c0_47 = arith.constant 0 : index
    %c0_48 = arith.constant 0 : index
    %c2_49 = arith.constant 2 : index
    %c0_50 = arith.constant 0 : index
    %22 = vector.load %arg3[%c0_46, %c0_47, %c0_48, %c2_49, %c0_50] : memref<1x1x1x100x4xbf16, #tpu.memory_space<vmem>>, vector<1x1x1x78x4xbf16>
    %23 = vector.shape_cast %22 : vector<1x1x1x78x4xbf16> to vector<78x4xbf16>
    %c0_51 = arith.constant 0 : index
    %c0_52 = arith.constant 0 : index
    %c0_53 = arith.constant 0 : index
    %c10_54 = arith.constant 10 : index
    %c0_55 = arith.constant 0 : index
    %24 = vector.load %arg3[%c0_51, %c0_52, %c0_53, %c10_54, %c0_55] : memref<1x1x1x100x4xbf16, #tpu.memory_space<vmem>>, vector<1x1x1x78x4xbf16>
    %25 = vector.shape_cast %24 : vector<1x1x1x78x4xbf16> to vector<78x4xbf16>
    %c0_56 = arith.constant 0 : index
    %c0_57 = arith.constant 0 : index
    %c0_58 = arith.constant 0 : index
    %c11_59 = arith.constant 11 : index
    %c0_60 = arith.constant 0 : index
    %26 = vector.load %arg3[%c0_56, %c0_57, %c0_58, %c11_59, %c0_60] : memref<1x1x1x100x4xbf16, #tpu.memory_space<vmem>>, vector<1x1x1x78x4xbf16>
    %27 = vector.shape_cast %26 : vector<1x1x1x78x4xbf16> to vector<78x4xbf16>
    %c0_61 = arith.constant 0 : index
    %c0_62 = arith.constant 0 : index
    %c0_63 = arith.constant 0 : index
    %c12_64 = arith.constant 12 : index
    %c0_65 = arith.constant 0 : index
    %28 = vector.load %arg3[%c0_61, %c0_62, %c0_63, %c12_64, %c0_65] : memref<1x1x1x100x4xbf16, #tpu.memory_space<vmem>>, vector<1x1x1x78x4xbf16>
    %29 = vector.shape_cast %28 : vector<1x1x1x78x4xbf16> to vector<78x4xbf16>
    %c0_66 = arith.constant 0 : index
    %c0_67 = arith.constant 0 : index
    %c0_68 = arith.constant 0 : index
    %c20_69 = arith.constant 20 : index
    %c0_70 = arith.constant 0 : index
    %30 = vector.load %arg3[%c0_66, %c0_67, %c0_68, %c20_69, %c0_70] : memref<1x1x1x100x4xbf16, #tpu.memory_space<vmem>>, vector<1x1x1x78x4xbf16>
    %31 = vector.shape_cast %30 : vector<1x1x1x78x4xbf16> to vector<78x4xbf16>
    %c0_71 = arith.constant 0 : index
    %c0_72 = arith.constant 0 : index
    %c0_73 = arith.constant 0 : index
    %c21_74 = arith.constant 21 : index
    %c0_75 = arith.constant 0 : index
    %32 = vector.load %arg3[%c0_71, %c0_72, %c0_73, %c21_74, %c0_75] : memref<1x1x1x100x4xbf16, #tpu.memory_space<vmem>>, vector<1x1x1x78x4xbf16>
    %33 = vector.shape_cast %32 : vector<1x1x1x78x4xbf16> to vector<78x4xbf16>
    %c0_76 = arith.constant 0 : index
    %c0_77 = arith.constant 0 : index
    %c0_78 = arith.constant 0 : index
    %c22_79 = arith.constant 22 : index
    %c0_80 = arith.constant 0 : index
    %34 = vector.load %arg3[%c0_76, %c0_77, %c0_78, %c22_79, %c0_80] : memref<1x1x1x100x4xbf16, #tpu.memory_space<vmem>>, vector<1x1x1x78x4xbf16>
    %35 = vector.shape_cast %34 : vector<1x1x1x78x4xbf16> to vector<78x4xbf16>
    %c0_81 = arith.constant 0 : index
    %c0_82 = arith.constant 0 : index
    %c0_83 = arith.constant 0 : index
    %c0_84 = arith.constant 0 : index
    %c0_85 = arith.constant 0 : index
    %36 = vector.load %arg4[%c0_81, %c0_82, %c0_83, %c0_84, %c0_85] : memref<1x1x1x100x4xbf16, #tpu.memory_space<vmem>>, vector<1x1x1x78x4xbf16>
    %37 = vector.shape_cast %36 : vector<1x1x1x78x4xbf16> to vector<78x4xbf16>
    %c0_86 = arith.constant 0 : index
    %c0_87 = arith.constant 0 : index
    %c0_88 = arith.constant 0 : index
    %c1_89 = arith.constant 1 : index
    %c0_90 = arith.constant 0 : index
    %38 = vector.load %arg4[%c0_86, %c0_87, %c0_88, %c1_89, %c0_90] : memref<1x1x1x100x4xbf16, #tpu.memory_space<vmem>>, vector<1x1x1x78x4xbf16>
    %39 = vector.shape_cast %38 : vector<1x1x1x78x4xbf16> to vector<78x4xbf16>
    %c0_91 = arith.constant 0 : index
    %c0_92 = arith.constant 0 : index
    %c0_93 = arith.constant 0 : index
    %c2_94 = arith.constant 2 : index
    %c0_95 = arith.constant 0 : index
    %40 = vector.load %arg4[%c0_91, %c0_92, %c0_93, %c2_94, %c0_95] : memref<1x1x1x100x4xbf16, #tpu.memory_space<vmem>>, vector<1x1x1x78x4xbf16>
    %41 = vector.shape_cast %40 : vector<1x1x1x78x4xbf16> to vector<78x4xbf16>
    %c0_96 = arith.constant 0 : index
    %c0_97 = arith.constant 0 : index
    %c0_98 = arith.constant 0 : index
    %c10_99 = arith.constant 10 : index
    %c0_100 = arith.constant 0 : index
    %42 = vector.load %arg4[%c0_96, %c0_97, %c0_98, %c10_99, %c0_100] : memref<1x1x1x100x4xbf16, #tpu.memory_space<vmem>>, vector<1x1x1x78x4xbf16>
    %43 = vector.shape_cast %42 : vector<1x1x1x78x4xbf16> to vector<78x4xbf16>
    %c0_101 = arith.constant 0 : index
    %c0_102 = arith.constant 0 : index
    %c0_103 = arith.constant 0 : index
    %c11_104 = arith.constant 11 : index
    %c0_105 = arith.constant 0 : index
    %44 = vector.load %arg4[%c0_101, %c0_102, %c0_103, %c11_104, %c0_105] : memref<1x1x1x100x4xbf16, #tpu.memory_space<vmem>>, vector<1x1x1x78x4xbf16>
    %45 = vector.shape_cast %44 : vector<1x1x1x78x4xbf16> to vector<78x4xbf16>
    %c0_106 = arith.constant 0 : index
    %c0_107 = arith.constant 0 : index
    %c0_108 = arith.constant 0 : index
    %c12_109 = arith.constant 12 : index
    %c0_110 = arith.constant 0 : index
    %46 = vector.load %arg4[%c0_106, %c0_107, %c0_108, %c12_109, %c0_110] : memref<1x1x1x100x4xbf16, #tpu.memory_space<vmem>>, vector<1x1x1x78x4xbf16>
    %47 = vector.shape_cast %46 : vector<1x1x1x78x4xbf16> to vector<78x4xbf16>
    %c0_111 = arith.constant 0 : index
    %c0_112 = arith.constant 0 : index
    %c0_113 = arith.constant 0 : index
    %c20_114 = arith.constant 20 : index
    %c0_115 = arith.constant 0 : index
    %48 = vector.load %arg4[%c0_111, %c0_112, %c0_113, %c20_114, %c0_115] : memref<1x1x1x100x4xbf16, #tpu.memory_space<vmem>>, vector<1x1x1x78x4xbf16>
    %49 = vector.shape_cast %48 : vector<1x1x1x78x4xbf16> to vector<78x4xbf16>
    %c0_116 = arith.constant 0 : index
    %c0_117 = arith.constant 0 : index
    %c0_118 = arith.constant 0 : index
    %c21_119 = arith.constant 21 : index
    %c0_120 = arith.constant 0 : index
    %50 = vector.load %arg4[%c0_116, %c0_117, %c0_118, %c21_119, %c0_120] : memref<1x1x1x100x4xbf16, #tpu.memory_space<vmem>>, vector<1x1x1x78x4xbf16>
    %51 = vector.shape_cast %50 : vector<1x1x1x78x4xbf16> to vector<78x4xbf16>
    %c0_121 = arith.constant 0 : index
    %c0_122 = arith.constant 0 : index
    %c0_123 = arith.constant 0 : index
    %c22_124 = arith.constant 22 : index
    %c0_125 = arith.constant 0 : index
    %52 = vector.load %arg4[%c0_121, %c0_122, %c0_123, %c22_124, %c0_125] : memref<1x1x1x100x4xbf16, #tpu.memory_space<vmem>>, vector<1x1x1x78x4xbf16>
    %53 = vector.shape_cast %52 : vector<1x1x1x78x4xbf16> to vector<78x4xbf16>
    %54 = tpu.concatenate %1, %3, %5, %7, %9, %11, %13, %15, %17, %19, %21, %23, %25, %27, %29, %31 in 1 : vector<78x4xbf16>, vector<78x4xbf16>, vector<78x4xbf16>, vector<78x4xbf16>, vector<78x4xbf16>, vector<78x4xbf16>, vector<78x4xbf16>, vector<78x4xbf16>, vector<78x4xbf16>, vector<78x4xbf16>, vector<78x4xbf16>, vector<78x4xbf16>, vector<78x4xbf16>, vector<78x4xbf16>, vector<78x4xbf16>, vector<78x4xbf16> -> vector<78x64xbf16>
    %55 = tpu.concatenate %33, %35, %37, %39, %41, %43, %45, %47, %49, %51, %53 in 1 : vector<78x4xbf16>, vector<78x4xbf16>, vector<78x4xbf16>, vector<78x4xbf16>, vector<78x4xbf16>, vector<78x4xbf16>, vector<78x4xbf16>, vector<78x4xbf16>, vector<78x4xbf16>, vector<78x4xbf16>, vector<78x4xbf16> -> vector<78x44xbf16>
    %56 = tpu.concatenate %54, %55 in 1 : vector<78x64xbf16>, vector<78x44xbf16> -> vector<78x108xbf16>
    %c0_126 = arith.constant 0 : index
    %c0_127 = arith.constant 0 : index
    %57 = vector.load %arg5[%c0_126, %c0_127] : memref<108x16xbf16, #tpu.memory_space<vmem>>, vector<108x16xbf16>
    %cst = arith.constant dense<0.000000e+00> : vector<78x16xf32>
    %58 = tpu.matmul %56, %57, %cst {dimension_numbers = #tpu.dot_dimension_numbers<[1], [0], [0], [1], [0, 0, 1, 1], [], []>} : vector<78x108xbf16>, vector<108x16xbf16>, vector<78x16xf32> -> vector<78x16xf32>
    %59 = arith.truncf %58 : vector<78x16xf32> to vector<78x16xbf16>
    %c0_128 = arith.constant 0 : index
    %c0_129 = arith.constant 0 : index
    %c0_130 = arith.constant 0 : index
    %c0_131 = arith.constant 0 : index
    %60 = vector.load %arg6[%c0_128, %c0_129, %c0_130, %c0_131] : memref<1x1x78x16xbf16, #tpu.memory_space<vmem>>, vector<1x1x78x16xbf16>
    %61 = vector.shape_cast %60 : vector<1x1x78x16xbf16> to vector<78x16xbf16>
    %62 = vector.shape_cast %59 : vector<78x16xbf16> to vector<1x1x78x16xbf16>
    tpu.vector_store %arg6[%c0_128, %c0_129, %c0_130, %c0_131], %62 {strides = array<i32>} : memref<1x1x78x16xbf16, #tpu.memory_space<vmem>>, vector<1x1x78x16xbf16>,
    return
  }
  func.func @transform_0(%arg0: i32, %arg1: i32) -> (i32, i32, i32, i32, i32) {
    %c1_i32 = arith.constant 1 : i32
    %0 = arith.muli %c1_i32, %arg1 : i32
    %c0_i32 = arith.constant 0 : i32
    %1 = arith.addi %0, %c0_i32 : i32
    %c0_i32_0 = arith.constant 0 : i32
    %c0_i32_1 = arith.constant 0 : i32
    %c0_i32_2 = arith.constant 0 : i32
    %c0_i32_3 = arith.constant 0 : i32
    return %arg0, %1, %c0_i32_0, %c0_i32_1, %c0_i32_2 : i32, i32, i32, i32, i32
  }
  func.func @transform_1(%arg0: i32, %arg1: i32) -> (i32, i32, i32, i32, i32) {
    %c1_i32 = arith.constant 1 : i32
    %0 = arith.muli %c1_i32, %arg1 : i32
    %c1_i32_0 = arith.constant 1 : i32
    %1 = arith.addi %0, %c1_i32_0 : i32
    %c0_i32 = arith.constant 0 : i32
    %c0_i32_1 = arith.constant 0 : i32
    %c0_i32_2 = arith.constant 0 : i32
    %c0_i32_3 = arith.constant 0 : i32
    return %arg0, %1, %c0_i32, %c0_i32_1, %c0_i32_2 : i32, i32, i32, i32, i32
  }
  func.func @transform_2(%arg0: i32, %arg1: i32) -> (i32, i32, i32, i32, i32) {
    %c1_i32 = arith.constant 1 : i32
    %0 = arith.muli %c1_i32, %arg1 : i32
    %c2_i32 = arith.constant 2 : i32
    %1 = arith.addi %0, %c2_i32 : i32
    %c0_i32 = arith.constant 0 : i32
    %c0_i32_0 = arith.constant 0 : i32
    %c0_i32_1 = arith.constant 0 : i32
    %c0_i32_2 = arith.constant 0 : i32
    return %arg0, %1, %c0_i32, %c0_i32_0, %c0_i32_1 : i32, i32, i32, i32, i32
  }
  func.func @transform_3(%arg0: i32, %arg1: i32) -> (i32, i32) {
    %c0_i32 = arith.constant 0 : i32
    %c0_i32_0 = arith.constant 0 : i32
    %c0_i32_1 = arith.constant 0 : i32
    return %c0_i32, %c0_i32_0 : i32, i32
  }
  func.func @transform_4(%arg0: i32, %arg1: i32) -> (i32, i32, i32, i32) {
    %c0_i32 = arith.constant 0 : i32
    %c0_i32_0 = arith.constant 0 : i32
    %c0_i32_1 = arith.constant 0 : i32
    return %arg0, %arg1, %c0_i32, %c0_i32_0 : i32, i32, i32, i32
  }
}

</mosaic_0001>

<llo_original>
// kernel: conv3d_pallas.1
$region0: #{conv3d_pallas.1}
  #allocation0 [shape = 'u32[]', space=smem, size = 0x4, offset = 0x4, fixed_abs, tag = 'smem constant byte address 0x4 - core index']
  #allocation1 [shape = 'u32[144,128]{1,0:T(1,128)}', space=vmem, size = 0x12000, scoped, tag = 'internal scratch']
  %s0 = inlined_call_operand.vmem [shape: bf16[2,10,1,100,4], index: 0, kind: input, shape index: {}, may-alias: {0,1,2}]
  %s1 = inlined_call_operand.vmem [shape: bf16[2,10,1,100,4], index: 1, kind: input, shape index: {}, may-alias: {0,1,2}]
  %s2 = inlined_call_operand.vmem [shape: bf16[2,10,1,100,4], index: 2, kind: input, shape index: {}, may-alias: {0,1,2}]
  %s3 = inlined_call_operand.vmem [shape: bf16[108,16], index: 3, kind: input, shape index: {}]
  %s4 = inlined_call_operand.vmem [shape: bf16[2,8,78,16], index: 4, kind: output, shape index: {}]
  %s5 = sld [smem:[#allocation0]]
  $region49: #{conv3d_pallas.1} parent=0
    _
  %s7 = ssub.s32 1, %s5
  %s8 = scalar_select 0, %s7, %s5
  loop: start=0, step=1, limit=18
  $region2: #{conv3d_pallas.1} parent=0 // loop_pre_header
    _
  $region3: #{conv3d_pallas.1} parent=0 // loop_header
    %s10 = sphi 0, %s14
    %p11 = scmp.ge.s32.totalorder %s10, 18
    %s17 = sphi 0, %s29
    %s18 = sphi 0, %s25
    %s19 = sphi 0, %s17
    %s20 = sphi 0, %s18
    %s21 = sphi 0, %s19
    %s22 = sphi 0, %s20
    %s34 = sphi 0, %s36
    %s37 = sphi 0, %s34
    %s38 = sphi 0, %s37
    %s54 = sphi 0, %s38
    %s64 = sphi 0, %s66
    %s67 = sphi 0, %s64
    %s68 = sphi 0, %s67
    %s84 = sphi 0, %s68
    %s94 = sphi 0, %s96
    %s97 = sphi 0, %s94
    %s98 = sphi 0, %s97
    %s114 = sphi 0, %s98
    %s118 = sphi 0, %s118
    %s120 = sphi 0, %s118
    %s121 = sphi 0, %s120
    %s135 = sphi 0, %s121
    %s143 = sphi 0, %s145
    %s146 = sphi 0, %s143
    %s147 = sphi 0, %s146
    %s163 = sphi 0, %s147
  $region4: #{conv3d_pallas.1} parent=0 // loop_header_branch
    %13 = sbr.rel (%p11) target = $region8
  $region5: #{conv3d_pallas.1} parent=0 // loop_body
    %s15 = ssub.s32 %s10, 1
    %s16 = ssub.s32 %s10, 2
    %s23 = sadd.s32 1, %s18
    %p24 = scmp.ge.s32.totalorder %s23, 8
    %s25 = scalar_select %p24, 0, %s23
    %s26 = sadd.s32 1, %s17
    %s27 = scalar_select %p24, %s26, %s17
    %p28 = scmp.ge.s32.totalorder %s27, 2
    %s29 = scalar_select %p28, 0, %s27
    %s30 = ssub.s32 %s17, %s29
    %s31 = ssub.s32 %s18, %s25
    %s32 = sor.u32 %s30, %s31
    %p33 = scmp.eq.s32.totalorder %s32, 0
    %s35 = sadd.s32 %s34, 1
    %s36 = scalar_select %p33, %s34, %s35
    %p39 = pneg %p33
    %p40 = scmp.eq.s32.totalorder %s10, 15
    %p41 = por %p39, %p40
    %p42 = scmp.ne.s32.totalorder %s34, %s37
    %p43 = scmp.eq.s32.totalorder %s10, 0
    %p44 = por %p42, %p43
    %p45 = scmp.ne.s32.totalorder %s34, %s37
    %p46 = scmp.eq.s32.totalorder %s15, 15
    %p47 = por %p45, %p46
    %p48 = scmp.ne.s32.totalorder %s37, %s38
    %p49 = scmp.eq.s32.totalorder %s15, 0
    %p50 = por %p48, %p49
    %p51 = scmp.ne.s32.totalorder %s37, %s38
    %p52 = scmp.eq.s32.totalorder %s16, 15
    %p53 = por %p51, %p52
    %p55 = scmp.ne.s32.totalorder %s38, %s54
    %p56 = scmp.eq.s32.totalorder %s16, 0
    %p57 = por %p55, %p56
    %s58 = sadd.s32 %s18, 1
    %s59 = sadd.s32 %s25, 1
    %s60 = ssub.s32 %s17, %s29
    %s61 = ssub.s32 %s58, %s59
    %s62 = sor.u32 %s60, %s61
    %p63 = scmp.eq.s32.totalorder %s62, 0
    %s65 = sadd.s32 %s64, 1
    %s66 = scalar_select %p63, %s64, %s65
    %p69 = pneg %p63
    %p70 = scmp.eq.s32.totalorder %s10, 15
    %p71 = por %p69, %p70
    %p72 = scmp.ne.s32.totalorder %s64, %s67
    %p73 = scmp.eq.s32.totalorder %s10, 0
    %p74 = por %p72, %p73
    %p75 = scmp.ne.s32.totalorder %s64, %s67
    %p76 = scmp.eq.s32.totalorder %s15, 15
    %p77 = por %p75, %p76
    %p78 = scmp.ne.s32.totalorder %s67, %s68
    %p79 = scmp.eq.s32.totalorder %s15, 0
    %p80 = por %p78, %p79
    %p81 = scmp.ne.s32.totalorder %s67, %s68
    %p82 = scmp.eq.s32.totalorder %s16, 15
    %p83 = por %p81, %p82
    %p85 = scmp.ne.s32.totalorder %s68, %s84
    %p86 = scmp.eq.s32.totalorder %s16, 0
    %p87 = por %p85, %p86
    %s88 = sadd.s32 %s18, 2
    %s89 = sadd.s32 %s25, 2
    %s90 = ssub.s32 %s17, %s29
    %s91 = ssub.s32 %s88, %s89
    %s92 = sor.u32 %s90, %s91
    %p93 = scmp.eq.s32.totalorder %s92, 0
    %s95 = sadd.s32 %s94, 1
    %s96 = scalar_select %p93, %s94, %s95
    %p99 = pneg %p93
    %p100 = scmp.eq.s32.totalorder %s10, 15
    %p101 = por %p99, %p100
    %p102 = scmp.ne.s32.totalorder %s94, %s97
    %p103 = scmp.eq.s32.totalorder %s10, 0
    %p104 = por %p102, %p103
    %p105 = scmp.ne.s32.totalorder %s94, %s97
    %p106 = scmp.eq.s32.totalorder %s15, 15
    %p107 = por %p105, %p106
    %p108 = scmp.ne.s32.totalorder %s97, %s98
    %p109 = scmp.eq.s32.totalorder %s15, 0
    %p110 = por %p108, %p109
    %p111 = scmp.ne.s32.totalorder %s97, %s98
    %p112 = scmp.eq.s32.totalorder %s16, 15
    %p113 = por %p111, %p112
    %p115 = scmp.ne.s32.totalorder %s98, %s114
    %p116 = scmp.eq.s32.totalorder %s16, 0
    %p117 = por %p115, %p116
    %s119 = sadd.s32 %s118, 1
    %p122 = scmp.eq.s32.totalorder %s10, 15
    %p123 = scmp.ne.s32.totalorder %s118, %s120
    %p124 = scmp.eq.s32.totalorder %s10, 0
    %p125 = por %p123, %p124
    %p126 = scmp.ne.s32.totalorder %s118, %s120
    %p127 = scmp.eq.s32.totalorder %s15, 15
    %p128 = por %p126, %p127
    %p129 = scmp.ne.s32.totalorder %s120, %s121
    %p130 = scmp.eq.s32.totalorder %s15, 0
    %p131 = por %p129, %p130
    %p132 = scmp.ne.s32.totalorder %s120, %s121
    %p133 = scmp.eq.s32.totalorder %s16, 15
    %p134 = por %p132, %p133
    %p136 = scmp.ne.s32.totalorder %s121, %s135
    %p137 = scmp.eq.s32.totalorder %s16, 0
    %p138 = por %p136, %p137
    %s139 = ssub.s32 %s17, %s29
    %s140 = ssub.s32 %s18, %s25
    %s141 = sor.u32 %s139, %s140
    %p142 = scmp.eq.s32.totalorder %s141, 0
    %s144 = sadd.s32 %s143, 1
    %s145 = scalar_select %p142, %s143, %s144
    %p148 = pneg %p142
    %p149 = scmp.eq.s32.totalorder %s10, 15
    %p150 = por %p148, %p149
    %p151 = scmp.ne.s32.totalorder %s143, %s146
    %p152 = scmp.eq.s32.totalorder %s10, 0
    %p153 = por %p151, %p152
    %p154 = scmp.ne.s32.totalorder %s143, %s146
    %p155 = scmp.eq.s32.totalorder %s15, 15
    %p156 = por %p154, %p155
    %p157 = scmp.ne.s32.totalorder %s146, %s147
    %p158 = scmp.eq.s32.totalorder %s15, 0
    %p159 = por %p157, %p158
    %p160 = scmp.ne.s32.totalorder %s146, %s147
    %p161 = scmp.eq.s32.totalorder %s16, 15
    %p162 = por %p160, %p161
    %p164 = scmp.ne.s32.totalorder %s147, %s163
    %p165 = scmp.eq.s32.totalorder %s16, 0
    %p166 = por %p164, %p165
    %p167 = scmp.le.s32.totalorder 1, %s10
    %p168 = scmp.lt.s32.totalorder %s10, 17
    %p169 = pnand %p167, %p168
    %p170 = pneg %p169
    // Predicated region
    $region9: #{conv3d_pallas.1} parent=5 // pred_check
      _
    $region10: #{conv3d_pallas.1} parent=5 // pred_check_branch
      %172 = sbr.rel (%p169) target = $region12
    $region11: #{conv3d_pallas.1} parent=5 // pred_region
      %s173 = ssub.s32 %s10, 1
      // Predicated region
      $region13: #{conv3d_pallas.1} parent=11 // pred_check
        %p174 = pneg %p131
      $region14: #{conv3d_pallas.1} parent=11 // pred_check_branch
        %176 = sbr.rel (%p174) target = $region16
      $region15: #{conv3d_pallas.1} parent=11 // pred_region
        _
      $region16: #{conv3d_pallas.1} parent=11 // pred_fallthru
        _
    $region12: #{conv3d_pallas.1} parent=5 // pred_fallthru
      _
    %p177 = scmp.lt.s32.totalorder %s10, 16
    // Predicated region
    $region17: #{conv3d_pallas.1} parent=5 // pred_check
      %p178 = pneg %p177
    $region18: #{conv3d_pallas.1} parent=5 // pred_check_branch
      %180 = sbr.rel (%p178) target = $region20
    $region19: #{conv3d_pallas.1} parent=5 // pred_region
      // Predicated region
      $region21: #{conv3d_pallas.1} parent=19 // pred_check
        %p181 = pneg %p44
      $region22: #{conv3d_pallas.1} parent=19 // pred_check_branch
        %183 = sbr.rel (%p181) target = $region24
      $region23: #{conv3d_pallas.1} parent=19 // pred_region
        %p184 = scmp.lt.s32.totalorder %s17, 1
        %s185 = scalar_select %p184, %s17, 1
        %p186 = scmp.lt.s32.totalorder %s18, 9
        %s187 = scalar_select %p186, %s18, 9
        %s188 = smul.addr %s187, 13
        %s189 = smul.addr %s185, 130
        %s190 = sadd.s32 %s188, %s189
        %s191 = smul.addr %s190, 4
        %s192 = scalar_lea.vmem %s0, %s191
      $region24: #{conv3d_pallas.1} parent=19 // pred_fallthru
        _
      // Predicated region
      $region25: #{conv3d_pallas.1} parent=19 // pred_check
        %p193 = pneg %p74
      $region26: #{conv3d_pallas.1} parent=19 // pred_check_branch
        %195 = sbr.rel (%p193) target = $region28
      $region27: #{conv3d_pallas.1} parent=19 // pred_region
        %s196 = sadd.s32 %s18, 1
        %p197 = scmp.lt.s32.totalorder %s17, 1
        %s198 = scalar_select %p197, %s17, 1
        %p199 = scmp.lt.s32.totalorder %s196, 9
        %s200 = scalar_select %p199, %s196, 9
        %s201 = smul.addr %s200, 13
        %s202 = smul.addr %s198, 130
        %s203 = sadd.s32 %s201, %s202
        %s204 = smul.addr %s203, 4
        %s205 = scalar_lea.vmem %s1, %s204
        %s206 = sadd.s32 %s18, 1
      $region28: #{conv3d_pallas.1} parent=19 // pred_fallthru
        _
      // Predicated region
      $region29: #{conv3d_pallas.1} parent=19 // pred_check
        %p207 = pneg %p104
      $region30: #{conv3d_pallas.1} parent=19 // pred_check_branch
        %209 = sbr.rel (%p207) target = $region32
      $region31: #{conv3d_pallas.1} parent=19 // pred_region
        %s210 = sadd.s32 %s18, 2
        %p211 = scmp.lt.s32.totalorder %s17, 1
        %s212 = scalar_select %p211, %s17, 1
        %p213 = scmp.lt.s32.totalorder %s210, 9
        %s214 = scalar_select %p213, %s210, 9
        %s215 = smul.addr %s214, 13
        %s216 = smul.addr %s212, 130
        %s217 = sadd.s32 %s215, %s216
        %s218 = smul.addr %s217, 4
        %s219 = scalar_lea.vmem %s2, %s218
        %s220 = sadd.s32 %s18, 2
      $region32: #{conv3d_pallas.1} parent=19 // pred_fallthru
        _
    $region20: #{conv3d_pallas.1} parent=5 // pred_fallthru
      _
    %p221 = scmp.le.s32.totalorder 1, %s10
    %p222 = scmp.lt.s32.totalorder %s10, 17
    %p223 = pnand %p221, %p222
    %p224 = pneg %p223
    // Predicated region
    $region33: #{conv3d_pallas.1} parent=5 // pred_check
      _
    $region34: #{conv3d_pallas.1} parent=5 // pred_check_branch
      %226 = sbr.rel (%p223) target = $region36
    $region35: #{conv3d_pallas.1} parent=5 // pred_region
      %s227 = ssub.s32 %s10, 1
      %p228 = scmp.lt.s32.totalorder %s19, 1
      %s229 = scalar_select %p228, %s19, 1
      %p230 = scmp.lt.s32.totalorder %s20, 9
      %s231 = scalar_select %p230, %s20, 9
      %s232 = smul.addr %s231, 13
      %s233 = smul.addr %s229, 130
      %s234 = sadd.s32 %s232, %s233
      %s235 = smul.addr %s234, 4
      %s236 = scalar_lea.vmem %s0, %s235
      %p237 = pneg %p50
      %p238 = pneg %p47
      %s239 = sadd.s32 %s20, 1
      %p240 = scmp.lt.s32.totalorder %s19, 1
      %s241 = scalar_select %p240, %s19, 1
      %p242 = scmp.lt.s32.totalorder %s239, 9
      %s243 = scalar_select %p242, %s239, 9
      %s244 = smul.addr %s243, 13
      %s245 = smul.addr %s241, 130
      %s246 = sadd.s32 %s244, %s245
      %s247 = smul.addr %s246, 4
      %s248 = scalar_lea.vmem %s1, %s247
      %p249 = pneg %p80
      %p250 = pneg %p77
      %s251 = sadd.s32 %s20, 2
      %p252 = scmp.lt.s32.totalorder %s19, 1
      %s253 = scalar_select %p252, %s19, 1
      %p254 = scmp.lt.s32.totalorder %s251, 9
      %s255 = scalar_select %p254, %s251, 9
      %s256 = smul.addr %s255, 13
      %s257 = smul.addr %s253, 130
      %s258 = sadd.s32 %s256, %s257
      %s259 = smul.addr %s258, 4
      %s260 = scalar_lea.vmem %s2, %s259
      %p261 = pneg %p110
      %p262 = pneg %p107
      %p263 = pneg %p131
      %p264 = pneg %p128
      %p265 = pneg %p159
      %p266 = pneg %p156
      %p267 = scmp.lt.s32.totalorder %s19, 1
      %s268 = scalar_select %p267, %s19, 1
      %p269 = scmp.lt.s32.totalorder %s20, 7
      %s270 = scalar_select %p269, %s20, 7
      %s271 = smul.addr %s270, 10
      %s272 = smul.addr %s268, 80
      %s273 = sadd.s32 %s271, %s272
      %s274 = smul.addr %s273, 4
      %s275 = scalar_lea.vmem %s4, %s274
      %p276 = scmp.lt.s32.totalorder %s19, 1
      %s277 = scalar_select %p276, %s19, 1
      %p278 = scmp.lt.s32.totalorder %s20, 9
      %s279 = scalar_select %p278, %s20, 9
      %s280 = smul.addr %s279, 13
      %s281 = smul.addr %s277, 130
      %s282 = sadd.s32 %s280, %s281
      %s283 = smul.addr %s282, 4
      %s284 = scalar_lea.vmem %s0, %s283
      %s285 = sadd.s32 %s20, 1
      %p286 = scmp.lt.s32.totalorder %s19, 1
      %s287 = scalar_select %p286, %s19, 1
      %p288 = scmp.lt.s32.totalorder %s285, 9
      %s289 = scalar_select %p288, %s285, 9
      %s290 = smul.addr %s289, 13
      %s291 = smul.addr %s287, 130
      %s292 = sadd.s32 %s290, %s291
      %s293 = smul.addr %s292, 4
      %s294 = scalar_lea.vmem %s1, %s293
      %s295 = sadd.s32 %s20, 1
      %s296 = sadd.s32 %s20, 2
      %p297 = scmp.lt.s32.totalorder %s19, 1
      %s298 = scalar_select %p297, %s19, 1
      %p299 = scmp.lt.s32.totalorder %s296, 9
      %s300 = scalar_select %p299, %s296, 9
      %s301 = smul.addr %s300, 13
      %s302 = smul.addr %s298, 130
      %s303 = sadd.s32 %s301, %s302
      %s304 = smul.addr %s303, 4
      %s305 = scalar_lea.vmem %s2, %s304
      %s306 = sadd.s32 %s20, 2
      %p307 = scmp.lt.s32.totalorder %s19, 1
      %s308 = scalar_select %p307, %s19, 1
      %p309 = scmp.lt.s32.totalorder %s20, 7
      %s310 = scalar_select %p309, %s20, 7
      %s311 = smul.addr %s310, 10
      %s312 = smul.addr %s308, 80
      %s313 = sadd.s32 %s311, %s312
      %s314 = smul.addr %s313, 4
      %s315 = scalar_lea.vmem %s4, %s314
      %v317 = vld [vmem:[%s284] sm:$0xf]
      %v318 = vld [vmem:[%s284 + $0x4] sm:$0xf]
      %v319 = vld [vmem:[%s284 + $0x8] sm:$0xf]
      %v320 = vld [vmem:[%s284 + $0xc] sm:$0xf]
      %v321 = vld [vmem:[%s284 + $0x10] sm:$0xf]
      %v322 = vld [vmem:[%s284 + $0x14] sm:$0xf]
      %v323 = vld [vmem:[%s284 + $0x18] sm:$0xf]
      %v324 = vld [vmem:[%s284 + $0x1c] sm:$0xf]
      %v325 = vld [vmem:[%s284 + $0x20] sm:$0xf]
      %v326 = vld [vmem:[%s284 + $0x24] sm:$0x7]
      %v327 = vld [vmem:[%s284 + $0x24] sm:$0xf]
      %v328 = vld [vmem:[%s284] sm:$0xe]
      %v329 = vld [vmem:[%s284 + $0x4] sm:$0xe]
      %v330 = vld [vmem:[%s284 + $0x28] sm:$0xf]
      %v331 = vld [vmem:[%s284 + $0x2c] sm:$0x1]
      %v332 = vld [vmem:[%s284 + $0x4] sm:$0xc]
      %v333 = vld [vmem:[%s284 + $0x8] sm:$0xc]
      %v334 = vld [vmem:[%s284 + $0x2c] sm:$0xf]
      %v335 = vld [vmem:[%s284 + $0x30] sm:$0x1]
      %v336 = vld [vmem:[%s284 + $0x30] sm:$0x3]
      %v337 = vld [vmem:[%s284 + $0x8] sm:$0x8]
      %v338 = vld [vmem:[%s294] sm:$0xf]
      %v339 = vld [vmem:[%s294 + $0x4] sm:$0xf]
      %v340 = vld [vmem:[%s294 + $0x8] sm:$0xf]
      %v341 = vld [vmem:[%s294 + $0xc] sm:$0xf]
      %v342 = vld [vmem:[%s294 + $0x10] sm:$0xf]
      %v343 = vld [vmem:[%s294 + $0x14] sm:$0xf]
      %v344 = vld [vmem:[%s294 + $0x18] sm:$0xf]
      %v345 = vld [vmem:[%s294 + $0x1c] sm:$0xf]
      %v346 = vld [vmem:[%s294 + $0x20] sm:$0xf]
      %v347 = vld [vmem:[%s294 + $0x24] sm:$0x7]
      %v348 = vld [vmem:[%s294 + $0x24] sm:$0xf]
      %v349 = vld [vmem:[%s294] sm:$0xe]
      %v350 = vld [vmem:[%s294 + $0x4] sm:$0xe]
      %v351 = vld [vmem:[%s294 + $0x28] sm:$0xf]
      %v352 = vld [vmem:[%s294 + $0x2c] sm:$0x1]
      %v353 = vld [vmem:[%s294 + $0x4] sm:$0xc]
      %v354 = vld [vmem:[%s294 + $0x8] sm:$0xc]
      %v355 = vld [vmem:[%s294 + $0x2c] sm:$0xf]
      %v356 = vld [vmem:[%s294 + $0x30] sm:$0x1]
      %v357 = vld [vmem:[%s294 + $0x30] sm:$0x3]
      %v358 = vld [vmem:[%s294 + $0x8] sm:$0x8]
      %v359 = vld [vmem:[%s305] sm:$0xf]
      %v360 = vld [vmem:[%s305 + $0x4] sm:$0xf]
      %v361 = vld [vmem:[%s305 + $0x8] sm:$0xf]
      %v362 = vld [vmem:[%s305 + $0xc] sm:$0xf]
      %v363 = vld [vmem:[%s305 + $0x10] sm:$0xf]
      %v364 = vld [vmem:[%s305 + $0x14] sm:$0xf]
      %v365 = vld [vmem:[%s305 + $0x18] sm:$0xf]
      %v366 = vld [vmem:[%s305 + $0x1c] sm:$0xf]
      %v367 = vld [vmem:[%s305 + $0x20] sm:$0xf]
      %v368 = vld [vmem:[%s305 + $0x24] sm:$0x7]
      %v369 = vld [vmem:[%s305 + $0x24] sm:$0xf]
      %v370 = vld [vmem:[%s305] sm:$0xe]
      %v371 = vld [vmem:[%s305 + $0x4] sm:$0xe]
      %v372 = vld [vmem:[%s305 + $0x28] sm:$0xf]
      %v373 = vld [vmem:[%s305 + $0x2c] sm:$0x1]
      %v374 = vld [vmem:[%s305 + $0x4] sm:$0xc]
      %v375 = vld [vmem:[%s305 + $0x8] sm:$0xc]
      %v376 = vld [vmem:[%s305 + $0x2c] sm:$0xf]
      %v377 = vld [vmem:[%s305 + $0x30] sm:$0x1]
      %v378 = vld [vmem:[%s305 + $0x30] sm:$0x3]
      %v379 = vld [vmem:[%s305 + $0x8] sm:$0x8]
      %v390 = vunpack.c.l.b16 %v317
      %v391 = vunpack.c.l.b16 %v318
      %v392 = vunpack.c.l.b16 %v319
      %v393 = vunpack.c.l.b16 %v320
      %v394 = vunpack.c.l.b16 %v321
      %v395 = vunpack.c.l.b16 %v322
      %v396 = vunpack.c.l.b16 %v323
      %v397 = vunpack.c.l.b16 %v324
      %v398 = vunpack.c.l.b16 %v325
      %v399 = vunpack.c.l.b16 %v326
      %v400 = vpack.c.b16 %v391, %v390
      %v401 = vpack.c.b16 %v393, %v392
      %v402 = vpack.c.b16 %v395, %v394
      %v403 = vpack.c.b16 %v397, %v396
      %v404 = vpack.c.b16 %v399, %v398
      %v406 = vunpack.c.l.b16 %v327
      %v407 = vpack.c.b16 %v406, %v398
      %vm408 = vsmask.f32 7424
      %v410 = vshrl.u32 %v400, 16
      %v412 = vshll.u32 %v400, 16
      %v414 = vrot.slane %v412, 1
      %v415 = vor.u32 %v410, %v414
      %v417 = vshll.u32 %v401, 16
      %v419 = vrot.slane %v417, 1
      %v420 = vsel %vm408, %v415, %v419
      %v421 = vshrl.u32 %v401, 16
      %v423 = vor.u32 %v421, %v419
      %v425 = vshll.u32 %v402, 16
      %v427 = vrot.slane %v425, 1
      %v428 = vsel %vm408, %v423, %v427
      %v429 = vshrl.u32 %v402, 16
      %v431 = vor.u32 %v429, %v427
      %v433 = vshll.u32 %v403, 16
      %v435 = vrot.slane %v433, 1
      %v436 = vsel %vm408, %v431, %v435
      %v437 = vshrl.u32 %v403, 16
      %v439 = vor.u32 %v437, %v435
      %v441 = vshll.u32 %v407, 16
      %v443 = vrot.slane %v441, 1
      %v444 = vsel %vm408, %v439, %v443
      %v445 = vshrl.u32 %v407, 16
      %v447 = vor.u32 %v445, %v443
      %448 = vrot.lane.b32.xlu0 %v420, 4
      %v449 = vpop.permute.xlu0 %448
      %450 = vrot.lane.b32.xlu0 %v428, 4
      %v451 = vpop.permute.xlu0 %450
      %452 = vrot.lane.b32.xlu0 %v436, 4
      %v453 = vpop.permute.xlu0 %452
      %454 = vrot.lane.b32.xlu0 %v444, 4
      %v455 = vpop.permute.xlu0 %454
      %456 = vrot.lane.b32.xlu0 %v447, 4
      %v457 = vpop.permute.xlu0 %456
      %v459 = vunpack.c.l.b16 %v328
      %v460 = vpack.c.b16 %v391, %v459
      %vm461 = vcmask 1046528
      %v462 = vrot.slane %v460, 1
      %v463 = vrot.slane %v401, 1
      %v464 = vsel %vm461, %v462, %v463
      %v465 = vrot.slane %v402, 1
      %v466 = vsel %vm461, %v463, %v465
      %v467 = vrot.slane %v403, 1
      %v468 = vsel %vm461, %v465, %v467
      %v469 = vrot.slane %v407, 1
      %v470 = vsel %vm461, %v467, %v469
      %471 = vrot.lane.b32.xlu0 %v464, 8
      %v472 = vpop.permute.xlu0 %471
      %473 = vrot.lane.b32.xlu0 %v466, 8
      %v474 = vpop.permute.xlu0 %473
      %475 = vrot.lane.b32.xlu0 %v468, 8
      %v476 = vpop.permute.xlu0 %475
      %477 = vrot.lane.b32.xlu0 %v470, 8
      %v478 = vpop.permute.xlu0 %477
      %479 = vrot.lane.b32.xlu0 %v469, 8
      %v480 = vpop.permute.xlu0 %479
      %v483 = vunpack.c.l.b16 %v329
      %v484 = vunpack.c.l.b16 %v330
      %v485 = vpack.c.b16 %v392, %v483
      %v486 = vpack.c.b16 %v394, %v393
      %v487 = vpack.c.b16 %v396, %v395
      %v488 = vpack.c.b16 %v398, %v397
      %v489 = vpack.c.b16 %v484, %v406
      %v490 = vrot.slane %v485, 1
      %v491 = vrot.slane %v486, 1
      %v492 = vsel %vm461, %v490, %v491
      %v493 = vrot.slane %v487, 1
      %v494 = vsel %vm461, %v491, %v493
      %v495 = vrot.slane %v488, 1
      %v496 = vsel %vm461, %v493, %v495
      %v497 = vrot.slane %v489, 1
      %v498 = vsel %vm461, %v495, %v497
      %499 = vrot.lane.b32.xlu0 %v492, 12
      %v500 = vpop.permute.xlu0 %499
      %501 = vrot.lane.b32.xlu0 %v494, 12
      %v502 = vpop.permute.xlu0 %501
      %503 = vrot.lane.b32.xlu0 %v496, 12
      %v504 = vpop.permute.xlu0 %503
      %505 = vrot.lane.b32.xlu0 %v498, 12
      %v506 = vpop.permute.xlu0 %505
      %507 = vrot.lane.b32.xlu0 %v497, 12
      %v508 = vpop.permute.xlu0 %507
      %v510 = vunpack.c.l.b16 %v331
      %v511 = vpack.c.b16 %v510, %v510
      %vm512 = vsmask.f32 6400
      %v514 = vshrl.u32 %v485, 16
      %v516 = vrot.slane %v514, 1
      %v517 = vshll.u32 %v485, 16
      %v519 = vrot.slane %v517, 2
      %v520 = vor.u32 %v516, %v519
      %v522 = vshrl.u32 %v486, 16
      %v524 = vrot.slane %v522, 1
      %v525 = vshll.u32 %v486, 16
      %v527 = vrot.slane %v525, 2
      %v528 = vor.u32 %v524, %v527
      %v529 = vsel %vm512, %v520, %v528
      %v531 = vshrl.u32 %v487, 16
      %v533 = vrot.slane %v531, 1
      %v534 = vshll.u32 %v487, 16
      %v536 = vrot.slane %v534, 2
      %v537 = vor.u32 %v533, %v536
      %v538 = vsel %vm512, %v528, %v537
      %v540 = vshrl.u32 %v488, 16
      %v542 = vrot.slane %v540, 1
      %v543 = vshll.u32 %v488, 16
      %v545 = vrot.slane %v543, 2
      %v546 = vor.u32 %v542, %v545
      %v547 = vsel %vm512, %v537, %v546
      %v549 = vshrl.u32 %v489, 16
      %v551 = vrot.slane %v549, 1
      %v552 = vshll.u32 %v489, 16
      %v554 = vrot.slane %v552, 2
      %v555 = vor.u32 %v551, %v554
      %v556 = vsel %vm512, %v546, %v555
      %v558 = vshll.u32 %v511, 16
      %v560 = vrot.slane %v558, 2
      %v561 = vsel %vm512, %v555, %v560
      %562 = vrot.lane.b32.xlu0 %v529, 16
      %v563 = vpop.permute.xlu0 %562
      %564 = vrot.lane.b32.xlu0 %v538, 16
      %v565 = vpop.permute.xlu0 %564
      %566 = vrot.lane.b32.xlu0 %v547, 16
      %v567 = vpop.permute.xlu0 %566
      %568 = vrot.lane.b32.xlu0 %v556, 16
      %v569 = vpop.permute.xlu0 %568
      %570 = vrot.lane.b32.xlu0 %v561, 16
      %v571 = vpop.permute.xlu0 %570
      %v573 = vunpack.c.l.b16 %v332
      %v574 = vpack.c.b16 %v392, %v573
      %vm575 = vcmask 1045504
      %v576 = vrot.slane %v574, 2
      %v577 = vrot.slane %v486, 2
      %v578 = vsel %vm575, %v576, %v577
      %v579 = vrot.slane %v487, 2
      %v580 = vsel %vm575, %v577, %v579
      %v581 = vrot.slane %v488, 2
      %v582 = vsel %vm575, %v579, %v581
      %v583 = vrot.slane %v489, 2
      %v584 = vsel %vm575, %v581, %v583
      %v585 = vrot.slane %v511, 2
      %v586 = vsel %vm575, %v583, %v585
      %587 = vrot.lane.b32.xlu0 %v578, 20
      %v588 = vpop.permute.xlu0 %587
      %589 = vrot.lane.b32.xlu0 %v580, 20
      %v590 = vpop.permute.xlu0 %589
      %591 = vrot.lane.b32.xlu0 %v582, 20
      %v592 = vpop.permute.xlu0 %591
      %593 = vrot.lane.b32.xlu0 %v584, 20
      %v594 = vpop.permute.xlu0 %593
      %595 = vrot.lane.b32.xlu0 %v586, 20
      %v596 = vpop.permute.xlu0 %595
      %v600 = vunpack.c.l.b16 %v333
      %v601 = vunpack.c.l.b16 %v334
      %v602 = vunpack.c.l.b16 %v335
      %v603 = vpack.c.b16 %v393, %v600
      %v604 = vpack.c.b16 %v601, %v484
      %v605 = vpack.c.b16 %v602, %v602
      %v606 = vrot.slane %v603, 2
      %v607 = vrot.slane %v402, 2
      %v608 = vsel %vm575, %v606, %v607
      %v609 = vrot.slane %v403, 2
      %v610 = vsel %vm575, %v607, %v609
      %v611 = vrot.slane %v407, 2
      %v612 = vsel %vm575, %v609, %v611
      %v613 = vrot.slane %v604, 2
      %v614 = vsel %vm575, %v611, %v613
      %v615 = vrot.slane %v605, 2
      %v616 = vsel %vm575, %v613, %v615
      %617 = vrot.lane.b32.xlu0 %v608, 24
      %v618 = vpop.permute.xlu0 %617
      %619 = vrot.lane.b32.xlu0 %v610, 24
      %v620 = vpop.permute.xlu0 %619
      %621 = vrot.lane.b32.xlu0 %v612, 24
      %v622 = vpop.permute.xlu0 %621
      %623 = vrot.lane.b32.xlu0 %v614, 24
      %v624 = vpop.permute.xlu0 %623
      %625 = vrot.lane.b32.xlu0 %v616, 24
      %v626 = vpop.permute.xlu0 %625
      %v628 = vunpack.c.l.b16 %v336
      %v629 = vpack.c.b16 %v628, %v628
      %vm630 = vsmask.f32 5376
      %v632 = vshrl.u32 %v603, 16
      %v634 = vrot.slane %v632, 2
      %v635 = vshll.u32 %v603, 16
      %v637 = vrot.slane %v635, 3
      %v638 = vor.u32 %v634, %v637
      %v639 = vrot.slane %v429, 2
      %v640 = vrot.slane %v425, 3
      %v641 = vor.u32 %v639, %v640
      %v642 = vsel %vm630, %v638, %v641
      %v643 = vrot.slane %v437, 2
      %v644 = vrot.slane %v433, 3
      %v645 = vor.u32 %v643, %v644
      %v646 = vsel %vm630, %v641, %v645
      %v647 = vrot.slane %v445, 2
      %v648 = vrot.slane %v441, 3
      %v649 = vor.u32 %v647, %v648
      %v650 = vsel %vm630, %v645, %v649
      %v652 = vshrl.u32 %v604, 16
      %v654 = vrot.slane %v652, 2
      %v655 = vshll.u32 %v604, 16
      %v657 = vrot.slane %v655, 3
      %v658 = vor.u32 %v654, %v657
      %v659 = vsel %vm630, %v649, %v658
      %v661 = vshrl.u32 %v629, 16
      %v663 = vrot.slane %v661, 2
      %v664 = vshll.u32 %v629, 16
      %v666 = vrot.slane %v664, 3
      %v667 = vor.u32 %v663, %v666
      %v668 = vsel %vm630, %v658, %v667
      %669 = vrot.lane.b32.xlu0 %v642, 28
      %v670 = vpop.permute.xlu0 %669
      %671 = vrot.lane.b32.xlu0 %v646, 28
      %v672 = vpop.permute.xlu0 %671
      %673 = vrot.lane.b32.xlu0 %v650, 28
      %v674 = vpop.permute.xlu0 %673
      %675 = vrot.lane.b32.xlu0 %v659, 28
      %v676 = vpop.permute.xlu0 %675
      %677 = vrot.lane.b32.xlu0 %v668, 28
      %v678 = vpop.permute.xlu0 %677
      %v680 = vunpack.c.l.b16 %v337
      %v681 = vpack.c.b16 %v393, %v680
      %vm682 = vcmask 1044480
      %v683 = vrot.slane %v681, 3
      %v684 = vrot.slane %v402, 3
      %v685 = vsel %vm682, %v683, %v684
      %v686 = vrot.slane %v403, 3
      %v687 = vsel %vm682, %v684, %v686
      %v688 = vrot.slane %v407, 3
      %v689 = vsel %vm682, %v686, %v688
      %v690 = vrot.slane %v604, 3
      %v691 = vsel %vm682, %v688, %v690
      %v692 = vrot.slane %v629, 3
      %v693 = vsel %vm682, %v690, %v692
      %694 = vrot.lane.b32.xlu0 %v685, 32
      %v695 = vpop.permute.xlu0 %694
      %696 = vrot.lane.b32.xlu0 %v687, 32
      %v697 = vpop.permute.xlu0 %696
      %698 = vrot.lane.b32.xlu0 %v689, 32
      %v699 = vpop.permute.xlu0 %698
      %700 = vrot.lane.b32.xlu0 %v691, 32
      %v701 = vpop.permute.xlu0 %700
      %702 = vrot.lane.b32.xlu0 %v693, 32
      %v703 = vpop.permute.xlu0 %702
      %v714 = vunpack.c.l.b16 %v338
      %v715 = vunpack.c.l.b16 %v339
      %v716 = vunpack.c.l.b16 %v340
      %v717 = vunpack.c.l.b16 %v341
      %v718 = vunpack.c.l.b16 %v342
      %v719 = vunpack.c.l.b16 %v343
      %v720 = vunpack.c.l.b16 %v344
      %v721 = vunpack.c.l.b16 %v345
      %v722 = vunpack.c.l.b16 %v346
      %v723 = vunpack.c.l.b16 %v347
      %v724 = vpack.c.b16 %v715, %v714
      %v725 = vpack.c.b16 %v717, %v716
      %v726 = vpack.c.b16 %v719, %v718
      %v727 = vpack.c.b16 %v721, %v720
      %v728 = vpack.c.b16 %v723, %v722
      %729 = vrot.lane.b32.xlu0 %v724, 36
      %v730 = vpop.permute.xlu0 %729
      %731 = vrot.lane.b32.xlu0 %v725, 36
      %v732 = vpop.permute.xlu0 %731
      %733 = vrot.lane.b32.xlu0 %v726, 36
      %v734 = vpop.permute.xlu0 %733
      %735 = vrot.lane.b32.xlu0 %v727, 36
      %v736 = vpop.permute.xlu0 %735
      %737 = vrot.lane.b32.xlu0 %v728, 36
      %v738 = vpop.permute.xlu0 %737
      %v740 = vunpack.c.l.b16 %v348
      %v741 = vpack.c.b16 %v740, %v722
      %v743 = vshrl.u32 %v724, 16
      %v745 = vshll.u32 %v724, 16
      %v747 = vrot.slane %v745, 1
      %v748 = vor.u32 %v743, %v747
      %v750 = vshll.u32 %v725, 16
      %v752 = vrot.slane %v750, 1
      %v753 = vsel %vm408, %v748, %v752
      %v754 = vshrl.u32 %v725, 16
      %v756 = vor.u32 %v754, %v752
      %v758 = vshll.u32 %v726, 16
      %v760 = vrot.slane %v758, 1
      %v761 = vsel %vm408, %v756, %v760
      %v762 = vshrl.u32 %v726, 16
      %v764 = vor.u32 %v762, %v760
      %v766 = vshll.u32 %v727, 16
      %v768 = vrot.slane %v766, 1
      %v769 = vsel %vm408, %v764, %v768
      %v770 = vshrl.u32 %v727, 16
      %v772 = vor.u32 %v770, %v768
      %v774 = vshll.u32 %v741, 16
      %v776 = vrot.slane %v774, 1
      %v777 = vsel %vm408, %v772, %v776
      %v778 = vshrl.u32 %v741, 16
      %v780 = vor.u32 %v778, %v776
      %781 = vrot.lane.b32.xlu0 %v753, 40
      %v782 = vpop.permute.xlu0 %781
      %783 = vrot.lane.b32.xlu0 %v761, 40
      %v784 = vpop.permute.xlu0 %783
      %785 = vrot.lane.b32.xlu0 %v769, 40
      %v786 = vpop.permute.xlu0 %785
      %787 = vrot.lane.b32.xlu0 %v777, 40
      %v788 = vpop.permute.xlu0 %787
      %789 = vrot.lane.b32.xlu0 %v780, 40
      %v790 = vpop.permute.xlu0 %789
      %v792 = vunpack.c.l.b16 %v349
      %v793 = vpack.c.b16 %v715, %v792
      %v794 = vrot.slane %v793, 1
      %v795 = vrot.slane %v725, 1
      %v796 = vsel %vm461, %v794, %v795
      %v797 = vrot.slane %v726, 1
      %v798 = vsel %vm461, %v795, %v797
      %v799 = vrot.slane %v727, 1
      %v800 = vsel %vm461, %v797, %v799
      %v801 = vrot.slane %v741, 1
      %v802 = vsel %vm461, %v799, %v801
      %803 = vrot.lane.b32.xlu0 %v796, 44
      %v804 = vpop.permute.xlu0 %803
      %805 = vrot.lane.b32.xlu0 %v798, 44
      %v806 = vpop.permute.xlu0 %805
      %807 = vrot.lane.b32.xlu0 %v800, 44
      %v808 = vpop.permute.xlu0 %807
      %809 = vrot.lane.b32.xlu0 %v802, 44
      %v810 = vpop.permute.xlu0 %809
      %811 = vrot.lane.b32.xlu0 %v801, 44
      %v812 = vpop.permute.xlu0 %811
      %v815 = vunpack.c.l.b16 %v350
      %v816 = vunpack.c.l.b16 %v351
      %v817 = vpack.c.b16 %v716, %v815
      %v818 = vpack.c.b16 %v718, %v717
      %v819 = vpack.c.b16 %v720, %v719
      %v820 = vpack.c.b16 %v722, %v721
      %v821 = vpack.c.b16 %v816, %v740
      %v822 = vrot.slane %v817, 1
      %v823 = vrot.slane %v818, 1
      %v824 = vsel %vm461, %v822, %v823
      %v825 = vrot.slane %v819, 1
      %v826 = vsel %vm461, %v823, %v825
      %v827 = vrot.slane %v820, 1
      %v828 = vsel %vm461, %v825, %v827
      %v829 = vrot.slane %v821, 1
      %v830 = vsel %vm461, %v827, %v829
      %831 = vrot.lane.b32.xlu0 %v824, 48
      %v832 = vpop.permute.xlu0 %831
      %833 = vrot.lane.b32.xlu0 %v826, 48
      %v834 = vpop.permute.xlu0 %833
      %835 = vrot.lane.b32.xlu0 %v828, 48
      %v836 = vpop.permute.xlu0 %835
      %837 = vrot.lane.b32.xlu0 %v830, 48
      %v838 = vpop.permute.xlu0 %837
      %839 = vrot.lane.b32.xlu0 %v829, 48
      %v840 = vpop.permute.xlu0 %839
      %v842 = vunpack.c.l.b16 %v352
      %v843 = vpack.c.b16 %v842, %v842
      %v845 = vshrl.u32 %v817, 16
      %v847 = vrot.slane %v845, 1
      %v848 = vshll.u32 %v817, 16
      %v850 = vrot.slane %v848, 2
      %v851 = vor.u32 %v847, %v850
      %v853 = vshrl.u32 %v818, 16
      %v855 = vrot.slane %v853, 1
      %v856 = vshll.u32 %v818, 16
      %v858 = vrot.slane %v856, 2
      %v859 = vor.u32 %v855, %v858
      %v860 = vsel %vm512, %v851, %v859
      %v862 = vshrl.u32 %v819, 16
      %v864 = vrot.slane %v862, 1
      %v865 = vshll.u32 %v819, 16
      %v867 = vrot.slane %v865, 2
      %v868 = vor.u32 %v864, %v867
      %v869 = vsel %vm512, %v859, %v868
      %v871 = vshrl.u32 %v820, 16
      %v873 = vrot.slane %v871, 1
      %v874 = vshll.u32 %v820, 16
      %v876 = vrot.slane %v874, 2
      %v877 = vor.u32 %v873, %v876
      %v878 = vsel %vm512, %v868, %v877
      %v880 = vshrl.u32 %v821, 16
      %v882 = vrot.slane %v880, 1
      %v883 = vshll.u32 %v821, 16
      %v885 = vrot.slane %v883, 2
      %v886 = vor.u32 %v882, %v885
      %v887 = vsel %vm512, %v877, %v886
      %v889 = vshll.u32 %v843, 16
      %v891 = vrot.slane %v889, 2
      %v892 = vsel %vm512, %v886, %v891
      %893 = vrot.lane.b32.xlu0 %v860, 52
      %v894 = vpop.permute.xlu0 %893
      %895 = vrot.lane.b32.xlu0 %v869, 52
      %v896 = vpop.permute.xlu0 %895
      %897 = vrot.lane.b32.xlu0 %v878, 52
      %v898 = vpop.permute.xlu0 %897
      %899 = vrot.lane.b32.xlu0 %v887, 52
      %v900 = vpop.permute.xlu0 %899
      %901 = vrot.lane.b32.xlu0 %v892, 52
      %v902 = vpop.permute.xlu0 %901
      %v904 = vunpack.c.l.b16 %v353
      %v905 = vpack.c.b16 %v716, %v904
      %v906 = vrot.slane %v905, 2
      %v907 = vrot.slane %v818, 2
      %v908 = vsel %vm575, %v906, %v907
      %v909 = vrot.slane %v819, 2
      %v910 = vsel %vm575, %v907, %v909
      %v911 = vrot.slane %v820, 2
      %v912 = vsel %vm575, %v909, %v911
      %v913 = vrot.slane %v821, 2
      %v914 = vsel %vm575, %v911, %v913
      %v915 = vrot.slane %v843, 2
      %v916 = vsel %vm575, %v913, %v915
      %917 = vrot.lane.b32.xlu0 %v908, 56
      %v918 = vpop.permute.xlu0 %917
      %919 = vrot.lane.b32.xlu0 %v910, 56
      %v920 = vpop.permute.xlu0 %919
      %921 = vrot.lane.b32.xlu0 %v912, 56
      %v922 = vpop.permute.xlu0 %921
      %923 = vrot.lane.b32.xlu0 %v914, 56
      %v924 = vpop.permute.xlu0 %923
      %925 = vrot.lane.b32.xlu0 %v916, 56
      %v926 = vpop.permute.xlu0 %925
      %v930 = vunpack.c.l.b16 %v354
      %v931 = vunpack.c.l.b16 %v355
      %v932 = vunpack.c.l.b16 %v356
      %v933 = vpack.c.b16 %v717, %v930
      %v934 = vpack.c.b16 %v931, %v816
      %v935 = vpack.c.b16 %v932, %v932
      %v936 = vrot.slane %v933, 2
      %v937 = vrot.slane %v726, 2
      %v938 = vsel %vm575, %v936, %v937
      %v939 = vrot.slane %v727, 2
      %v940 = vsel %vm575, %v937, %v939
      %v941 = vrot.slane %v741, 2
      %v942 = vsel %vm575, %v939, %v941
      %v943 = vrot.slane %v934, 2
      %v944 = vsel %vm575, %v941, %v943
      %v945 = vrot.slane %v935, 2
      %v946 = vsel %vm575, %v943, %v945
      %947 = vrot.lane.b32.xlu0 %v938, 60
      %v948 = vpop.permute.xlu0 %947
      %949 = vrot.lane.b32.xlu0 %v940, 60
      %v950 = vpop.permute.xlu0 %949
      %951 = vrot.lane.b32.xlu0 %v942, 60
      %v952 = vpop.permute.xlu0 %951
      %953 = vrot.lane.b32.xlu0 %v944, 60
      %v954 = vpop.permute.xlu0 %953
      %955 = vrot.lane.b32.xlu0 %v946, 60
      %v956 = vpop.permute.xlu0 %955
      %vm957 = vcmask 31744
      %v959 = vsel %vm957, %v400, %v449
      %v961 = vsel %vm957, %v401, %v451
      %v963 = vsel %vm957, %v402, %v453
      %v965 = vsel %vm957, %v403, %v455
      %v968 = vsel %vm957, %v404, %v457
      %vm969 = vcmask 64512
      %v971 = vsel %vm969, %v959, %v472
      %v973 = vsel %vm969, %v961, %v474
      %v975 = vsel %vm969, %v963, %v476
      %v977 = vsel %vm969, %v965, %v478
      %v979 = vsel %vm969, %v968, %v480
      %vm980 = vcmask 97280
      %v982 = vsel %vm980, %v971, %v500
      %v984 = vsel %vm980, %v973, %v502
      %v986 = vsel %vm980, %v975, %v504
      %v988 = vsel %vm980, %v977, %v506
      %v990 = vsel %vm980, %v979, %v508
      %vm991 = vcmask 130048
      %v993 = vsel %vm991, %v982, %v563
      %v995 = vsel %vm991, %v984, %v565
      %v997 = vsel %vm991, %v986, %v567
      %v999 = vsel %vm991, %v988, %v569
      %v1001 = vsel %vm991, %v990, %v571
      %vm1002 = vcmask 162816
      %v1004 = vsel %vm1002, %v993, %v588
      %v1006 = vsel %vm1002, %v995, %v590
      %v1008 = vsel %vm1002, %v997, %v592
      %v1010 = vsel %vm1002, %v999, %v594
      %v1012 = vsel %vm1002, %v1001, %v596
      %vm1013 = vcmask 195584
      %v1015 = vsel %vm1013, %v1004, %v618
      %v1017 = vsel %vm1013, %v1006, %v620
      %v1019 = vsel %vm1013, %v1008, %v622
      %v1021 = vsel %vm1013, %v1010, %v624
      %v1023 = vsel %vm1013, %v1012, %v626
      %vm1024 = vcmask 228352
      %v1026 = vsel %vm1024, %v1015, %v670
      %v1028 = vsel %vm1024, %v1017, %v672
      %v1030 = vsel %vm1024, %v1019, %v674
      %v1032 = vsel %vm1024, %v1021, %v676
      %v1034 = vsel %vm1024, %v1023, %v678
      %vm1035 = vcmask 261120
      %v1037 = vsel %vm1035, %v1026, %v695
      %v1039 = vsel %vm1035, %v1028, %v697
      %v1041 = vsel %vm1035, %v1030, %v699
      %v1043 = vsel %vm1035, %v1032, %v701
      %v1045 = vsel %vm1035, %v1034, %v703
      %vm1046 = vcmask 293888
      %v1048 = vsel %vm1046, %v1037, %v730
      %v1050 = vsel %vm1046, %v1039, %v732
      %v1052 = vsel %vm1046, %v1041, %v734
      %v1054 = vsel %vm1046, %v1043, %v736
      %v1056 = vsel %vm1046, %v1045, %v738
      %vm1057 = vcmask 326656
      %v1059 = vsel %vm1057, %v1048, %v782
      %v1061 = vsel %vm1057, %v1050, %v784
      %v1063 = vsel %vm1057, %v1052, %v786
      %v1065 = vsel %vm1057, %v1054, %v788
      %v1067 = vsel %vm1057, %v1056, %v790
      %vm1068 = vcmask 359424
      %v1070 = vsel %vm1068, %v1059, %v804
      %v1072 = vsel %vm1068, %v1061, %v806
      %v1074 = vsel %vm1068, %v1063, %v808
      %v1076 = vsel %vm1068, %v1065, %v810
      %v1078 = vsel %vm1068, %v1067, %v812
      %vm1079 = vcmask 392192
      %v1081 = vsel %vm1079, %v1070, %v832
      %v1083 = vsel %vm1079, %v1072, %v834
      %v1085 = vsel %vm1079, %v1074, %v836
      %v1087 = vsel %vm1079, %v1076, %v838
      %v1089 = vsel %vm1079, %v1078, %v840
      %vm1090 = vcmask 424960
      %v1092 = vsel %vm1090, %v1081, %v894
      %v1094 = vsel %vm1090, %v1083, %v896
      %v1096 = vsel %vm1090, %v1085, %v898
      %v1098 = vsel %vm1090, %v1087, %v900
      %v1100 = vsel %vm1090, %v1089, %v902
      %vm1101 = vcmask 457728
      %v1103 = vsel %vm1101, %v1092, %v918
      %v1105 = vsel %vm1101, %v1094, %v920
      %v1107 = vsel %vm1101, %v1096, %v922
      %v1109 = vsel %vm1101, %v1098, %v924
      %v1111 = vsel %vm1101, %v1100, %v926
      %vm1112 = vcmask 490496
      %v1114 = vsel %vm1112, %v1103, %v948
      %v1116 = vsel %vm1112, %v1105, %v950
      %v1118 = vsel %vm1112, %v1107, %v952
      %v1120 = vsel %vm1112, %v1109, %v954
      %v1122 = vsel %vm1112, %v1111, %v956
      %v1124 = vunpack.c.l.b16 %v357
      %v1125 = vpack.c.b16 %v1124, %v1124
      %v1127 = vunpack.c.l.b16 %v358
      %v1128 = vpack.c.b16 %v717, %v1127
      %v1130 = vshrl.u32 %v1128, 16
      %v1132 = vshll.u32 %v1128, 16
      %v1134 = vrot.slane %v1132, 1
      %v1135 = vor.u32 %v1130, %v1134
      %v1136 = vsel %vm408, %v1135, %v760
      %v1138 = vshll.u32 %v934, 16
      %v1140 = vrot.slane %v1138, 1
      %v1141 = vsel %vm408, %v780, %v1140
      %v1142 = vshrl.u32 %v934, 16
      %v1144 = vor.u32 %v1142, %v1140
      %v1146 = vshll.u32 %v1125, 16
      %v1148 = vrot.slane %v1146, 1
      %v1149 = vsel %vm408, %v1144, %v1148
      %v1150 = vshrl.u32 %v1125, 16
      %v1152 = vor.u32 %v1150, %v1148
      %1153 = vrot.lane.b32.xlu0 %v1136, 4
      %v1154 = vpop.permute.xlu0 %1153
      %1155 = vrot.lane.b32.xlu0 %v769, 4
      %v1156 = vpop.permute.xlu0 %1155
      %1157 = vrot.lane.b32.xlu0 %v777, 4
      %v1158 = vpop.permute.xlu0 %1157
      %1159 = vrot.lane.b32.xlu0 %v1141, 4
      %v1160 = vpop.permute.xlu0 %1159
      %1161 = vrot.lane.b32.xlu0 %v1149, 4
      %v1162 = vpop.permute.xlu0 %1161
      %1163 = vrot.lane.b32.xlu0 %v1152, 4
      %v1164 = vpop.permute.xlu0 %1163
      %v1175 = vunpack.c.l.b16 %v359
      %v1176 = vunpack.c.l.b16 %v360
      %v1177 = vunpack.c.l.b16 %v361
      %v1178 = vunpack.c.l.b16 %v362
      %v1179 = vunpack.c.l.b16 %v363
      %v1180 = vunpack.c.l.b16 %v364
      %v1181 = vunpack.c.l.b16 %v365
      %v1182 = vunpack.c.l.b16 %v366
      %v1183 = vunpack.c.l.b16 %v367
      %v1184 = vunpack.c.l.b16 %v368
      %v1185 = vpack.c.b16 %v1176, %v1175
      %v1186 = vpack.c.b16 %v1178, %v1177
      %v1187 = vpack.c.b16 %v1180, %v1179
      %v1188 = vpack.c.b16 %v1182, %v1181
      %v1189 = vpack.c.b16 %v1184, %v1183
      %vm1190 = vsmask.f32 2304
      %v1192 = vshrl.u32 %v1185, 16
      %v1194 = vrot.slane %v1192, 5
      %v1195 = vshll.u32 %v1185, 16
      %v1197 = vrot.slane %v1195, 6
      %v1198 = vor.u32 %v1194, %v1197
      %v1200 = vshrl.u32 %v1186, 16
      %v1202 = vrot.slane %v1200, 5
      %v1203 = vshll.u32 %v1186, 16
      %v1205 = vrot.slane %v1203, 6
      %v1206 = vor.u32 %v1202, %v1205
      %v1207 = vsel %vm1190, %v1198, %v1206
      %v1209 = vshrl.u32 %v1187, 16
      %v1211 = vrot.slane %v1209, 5
      %v1212 = vshll.u32 %v1187, 16
      %v1214 = vrot.slane %v1212, 6
      %v1215 = vor.u32 %v1211, %v1214
      %v1216 = vsel %vm1190, %v1206, %v1215
      %v1218 = vshrl.u32 %v1188, 16
      %v1220 = vrot.slane %v1218, 5
      %v1221 = vshll.u32 %v1188, 16
      %v1223 = vrot.slane %v1221, 6
      %v1224 = vor.u32 %v1220, %v1223
      %v1225 = vsel %vm1190, %v1215, %v1224
      %v1227 = vshrl.u32 %v1189, 16
      %v1229 = vrot.slane %v1227, 5
      %v1230 = vshll.u32 %v1189, 16
      %v1232 = vrot.slane %v1230, 6
      %v1233 = vor.u32 %v1229, %v1232
      %v1234 = vsel %vm1190, %v1224, %v1233
      %1235 = vrot.lane.b32.xlu0 %v1198, 8
      %v1236 = vpop.permute.xlu0 %1235
      %1237 = vrot.lane.b32.xlu0 %v1207, 8
      %v1238 = vpop.permute.xlu0 %1237
      %1239 = vrot.lane.b32.xlu0 %v1216, 8
      %v1240 = vpop.permute.xlu0 %1239
      %1241 = vrot.lane.b32.xlu0 %v1225, 8
      %v1242 = vpop.permute.xlu0 %1241
      %1243 = vrot.lane.b32.xlu0 %v1234, 8
      %v1244 = vpop.permute.xlu0 %1243
      %1245 = vrot.lane.b32.xlu0 %v1233, 8
      %v1246 = vpop.permute.xlu0 %1245
      %v1248 = vunpack.c.l.b16 %v369
      %v1249 = vpack.c.b16 %v1248, %v1183
      %vm1250 = vcmask 1041408
      %v1251 = vrot.slane %v1185, 6
      %v1252 = vrot.slane %v1186, 6
      %v1253 = vsel %vm1250, %v1251, %v1252
      %v1254 = vrot.slane %v1187, 6
      %v1255 = vsel %vm1250, %v1252, %v1254
      %v1256 = vrot.slane %v1188, 6
      %v1257 = vsel %vm1250, %v1254, %v1256
      %v1258 = vrot.slane %v1249, 6
      %v1259 = vsel %vm1250, %v1256, %v1258
      %1260 = vrot.lane.b32.xlu0 %v1251, 12
      %v1261 = vpop.permute.xlu0 %1260
      %1262 = vrot.lane.b32.xlu0 %v1253, 12
      %v1263 = vpop.permute.xlu0 %1262
      %1264 = vrot.lane.b32.xlu0 %v1255, 12
      %v1265 = vpop.permute.xlu0 %1264
      %1266 = vrot.lane.b32.xlu0 %v1257, 12
      %v1267 = vpop.permute.xlu0 %1266
      %1268 = vrot.lane.b32.xlu0 %v1259, 12
      %v1269 = vpop.permute.xlu0 %1268
      %1270 = vrot.lane.b32.xlu0 %v1258, 12
      %v1271 = vpop.permute.xlu0 %1270
      %v1273 = vunpack.c.l.b16 %v370
      %v1274 = vpack.c.b16 %v1176, %v1273
      %vm1275 = vsmask.f32 1280
      %v1277 = vshrl.u32 %v1274, 16
      %v1279 = vrot.slane %v1277, 6
      %v1280 = vshll.u32 %v1274, 16
      %v1282 = vrot.slane %v1280, 7
      %v1283 = vor.u32 %v1279, %v1282
      %v1284 = vrot.slane %v1200, 6
      %v1285 = vrot.slane %v1203, 7
      %v1286 = vor.u32 %v1284, %v1285
      %v1287 = vsel %vm1275, %v1283, %v1286
      %v1288 = vrot.slane %v1209, 6
      %v1289 = vrot.slane %v1212, 7
      %v1290 = vor.u32 %v1288, %v1289
      %v1291 = vsel %vm1275, %v1286, %v1290
      %v1292 = vrot.slane %v1218, 6
      %v1293 = vrot.slane %v1221, 7
      %v1294 = vor.u32 %v1292, %v1293
      %v1295 = vsel %vm1275, %v1290, %v1294
      %v1297 = vshrl.u32 %v1249, 16
      %v1299 = vrot.slane %v1297, 6
      %v1300 = vshll.u32 %v1249, 16
      %v1302 = vrot.slane %v1300, 7
      %v1303 = vor.u32 %v1299, %v1302
      %v1304 = vsel %vm1275, %v1294, %v1303
      %1305 = vrot.lane.b32.xlu0 %v1283, 16
      %v1306 = vpop.permute.xlu0 %1305
      %1307 = vrot.lane.b32.xlu0 %v1287, 16
      %v1308 = vpop.permute.xlu0 %1307
      %1309 = vrot.lane.b32.xlu0 %v1291, 16
      %v1310 = vpop.permute.xlu0 %1309
      %1311 = vrot.lane.b32.xlu0 %v1295, 16
      %v1312 = vpop.permute.xlu0 %1311
      %1313 = vrot.lane.b32.xlu0 %v1304, 16
      %v1314 = vpop.permute.xlu0 %1313
      %1315 = vrot.lane.b32.xlu0 %v1303, 16
      %v1316 = vpop.permute.xlu0 %1315
      %v1319 = vunpack.c.l.b16 %v371
      %v1320 = vunpack.c.l.b16 %v372
      %v1321 = vpack.c.b16 %v1177, %v1319
      %v1322 = vpack.c.b16 %v1179, %v1178
      %v1323 = vpack.c.b16 %v1181, %v1180
      %v1324 = vpack.c.b16 %v1183, %v1182
      %v1325 = vpack.c.b16 %v1320, %v1248
      %v1327 = vshrl.u32 %v1321, 16
      %v1329 = vrot.slane %v1327, 6
      %v1330 = vshll.u32 %v1321, 16
      %v1332 = vrot.slane %v1330, 7
      %v1333 = vor.u32 %v1329, %v1332
      %v1335 = vshrl.u32 %v1322, 16
      %v1337 = vrot.slane %v1335, 6
      %v1338 = vshll.u32 %v1322, 16
      %v1340 = vrot.slane %v1338, 7
      %v1341 = vor.u32 %v1337, %v1340
      %v1342 = vsel %vm1275, %v1333, %v1341
      %v1344 = vshrl.u32 %v1323, 16
      %v1346 = vrot.slane %v1344, 6
      %v1347 = vshll.u32 %v1323, 16
      %v1349 = vrot.slane %v1347, 7
      %v1350 = vor.u32 %v1346, %v1349
      %v1351 = vsel %vm1275, %v1341, %v1350
      %v1353 = vshrl.u32 %v1324, 16
      %v1355 = vrot.slane %v1353, 6
      %v1356 = vshll.u32 %v1324, 16
      %v1358 = vrot.slane %v1356, 7
      %v1359 = vor.u32 %v1355, %v1358
      %v1360 = vsel %vm1275, %v1350, %v1359
      %v1362 = vshrl.u32 %v1325, 16
      %v1364 = vrot.slane %v1362, 6
      %v1365 = vshll.u32 %v1325, 16
      %v1367 = vrot.slane %v1365, 7
      %v1368 = vor.u32 %v1364, %v1367
      %v1369 = vsel %vm1275, %v1359, %v1368
      %1370 = vrot.lane.b32.xlu0 %v1333, 20
      %v1371 = vpop.permute.xlu0 %1370
      %1372 = vrot.lane.b32.xlu0 %v1342, 20
      %v1373 = vpop.permute.xlu0 %1372
      %1374 = vrot.lane.b32.xlu0 %v1351, 20
      %v1375 = vpop.permute.xlu0 %1374
      %1376 = vrot.lane.b32.xlu0 %v1360, 20
      %v1377 = vpop.permute.xlu0 %1376
      %1378 = vrot.lane.b32.xlu0 %v1369, 20
      %v1379 = vpop.permute.xlu0 %1378
      %1380 = vrot.lane.b32.xlu0 %v1368, 20
      %v1381 = vpop.permute.xlu0 %1380
      %v1383 = vunpack.c.l.b16 %v373
      %v1384 = vpack.c.b16 %v1383, %v1383
      %vm1385 = vcmask 1040384
      %v1386 = vrot.slane %v1321, 7
      %v1387 = vrot.slane %v1322, 7
      %v1388 = vsel %vm1385, %v1386, %v1387
      %v1389 = vrot.slane %v1323, 7
      %v1390 = vsel %vm1385, %v1387, %v1389
      %v1391 = vrot.slane %v1324, 7
      %v1392 = vsel %vm1385, %v1389, %v1391
      %v1393 = vrot.slane %v1325, 7
      %v1394 = vsel %vm1385, %v1391, %v1393
      %v1395 = vrot.slane %v1384, 7
      %v1396 = vsel %vm1385, %v1393, %v1395
      %1397 = vrot.lane.b32.xlu0 %v1386, 24
      %v1398 = vpop.permute.xlu0 %1397
      %1399 = vrot.lane.b32.xlu0 %v1388, 24
      %v1400 = vpop.permute.xlu0 %1399
      %1401 = vrot.lane.b32.xlu0 %v1390, 24
      %v1402 = vpop.permute.xlu0 %1401
      %1403 = vrot.lane.b32.xlu0 %v1392, 24
      %v1404 = vpop.permute.xlu0 %1403
      %1405 = vrot.lane.b32.xlu0 %v1394, 24
      %v1406 = vpop.permute.xlu0 %1405
      %1407 = vrot.lane.b32.xlu0 %v1396, 24
      %v1408 = vpop.permute.xlu0 %1407
      %v1410 = vunpack.c.l.b16 %v374
      %v1411 = vpack.c.b16 %v1177, %v1410
      %vm1412 = vsmask.f32 256
      %v1414 = vshrl.u32 %v1411, 16
      %v1416 = vrot.slane %v1414, 7
      %v1417 = vshll.u32 %v1411, 16
      %v1419 = vor.u32 %v1416, %v1417
      %v1420 = vrot.slane %v1335, 7
      %v1421 = vor.u32 %v1420, %v1338
      %v1422 = vsel %vm1412, %v1416, %v1421
      %v1423 = vrot.slane %v1344, 7
      %v1424 = vor.u32 %v1423, %v1347
      %v1425 = vsel %vm1412, %v1420, %v1424
      %v1426 = vrot.slane %v1353, 7
      %v1427 = vor.u32 %v1426, %v1356
      %v1428 = vsel %vm1412, %v1423, %v1427
      %v1429 = vrot.slane %v1362, 7
      %v1430 = vor.u32 %v1429, %v1365
      %v1431 = vsel %vm1412, %v1426, %v1430
      %v1433 = vshrl.u32 %v1384, 16
      %v1435 = vrot.slane %v1433, 7
      %v1436 = vshll.u32 %v1384, 16
      %v1438 = vor.u32 %v1435, %v1436
      %v1439 = vsel %vm1412, %v1429, %v1438
      %1440 = vrot.lane.b32.xlu0 %v1419, 28
      %v1441 = vpop.permute.xlu0 %1440
      %1442 = vrot.lane.b32.xlu0 %v1422, 28
      %v1443 = vpop.permute.xlu0 %1442
      %1444 = vrot.lane.b32.xlu0 %v1425, 28
      %v1445 = vpop.permute.xlu0 %1444
      %1446 = vrot.lane.b32.xlu0 %v1428, 28
      %v1447 = vpop.permute.xlu0 %1446
      %1448 = vrot.lane.b32.xlu0 %v1431, 28
      %v1449 = vpop.permute.xlu0 %1448
      %1450 = vrot.lane.b32.xlu0 %v1439, 28
      %v1451 = vpop.permute.xlu0 %1450
      %v1455 = vunpack.c.l.b16 %v375
      %v1456 = vunpack.c.l.b16 %v376
      %v1457 = vunpack.c.l.b16 %v377
      %v1458 = vpack.c.b16 %v1178, %v1455
      %v1459 = vpack.c.b16 %v1456, %v1320
      %v1460 = vpack.c.b16 %v1457, %v1457
      %v1462 = vshrl.u32 %v1458, 16
      %v1464 = vrot.slane %v1462, 7
      %v1465 = vshll.u32 %v1458, 16
      %v1467 = vor.u32 %v1464, %v1465
      %v1468 = vrot.slane %v1209, 7
      %v1469 = vor.u32 %v1468, %v1212
      %v1470 = vsel %vm1412, %v1464, %v1469
      %v1471 = vrot.slane %v1218, 7
      %v1472 = vor.u32 %v1471, %v1221
      %v1473 = vsel %vm1412, %v1468, %v1472
      %v1474 = vrot.slane %v1297, 7
      %v1475 = vor.u32 %v1474, %v1300
      %v1476 = vsel %vm1412, %v1471, %v1475
      %v1478 = vshrl.u32 %v1459, 16
      %v1480 = vrot.slane %v1478, 7
      %v1481 = vshll.u32 %v1459, 16
      %v1483 = vor.u32 %v1480, %v1481
      %v1484 = vsel %vm1412, %v1474, %v1483
      %v1486 = vshrl.u32 %v1460, 16
      %v1488 = vrot.slane %v1486, 7
      %v1489 = vshll.u32 %v1460, 16
      %v1491 = vor.u32 %v1488, %v1489
      %v1492 = vsel %vm1412, %v1480, %v1491
      %1493 = vrot.lane.b32.xlu0 %v1467, 32
      %v1494 = vpop.permute.xlu0 %1493
      %1495 = vrot.lane.b32.xlu0 %v1470, 32
      %v1496 = vpop.permute.xlu0 %1495
      %1497 = vrot.lane.b32.xlu0 %v1473, 32
      %v1498 = vpop.permute.xlu0 %1497
      %1499 = vrot.lane.b32.xlu0 %v1476, 32
      %v1500 = vpop.permute.xlu0 %1499
      %1501 = vrot.lane.b32.xlu0 %v1484, 32
      %v1502 = vpop.permute.xlu0 %1501
      %1503 = vrot.lane.b32.xlu0 %v1492, 32
      %v1504 = vpop.permute.xlu0 %1503
      %v1506 = vunpack.c.l.b16 %v378
      %v1507 = vpack.c.b16 %v1506, %v1506
      %1508 = vrot.lane.b32.xlu0 %v1458, 36
      %v1509 = vpop.permute.xlu0 %1508
      %1510 = vrot.lane.b32.xlu0 %v1187, 36
      %v1511 = vpop.permute.xlu0 %1510
      %1512 = vrot.lane.b32.xlu0 %v1188, 36
      %v1513 = vpop.permute.xlu0 %1512
      %1514 = vrot.lane.b32.xlu0 %v1249, 36
      %v1515 = vpop.permute.xlu0 %1514
      %1516 = vrot.lane.b32.xlu0 %v1459, 36
      %v1517 = vpop.permute.xlu0 %1516
      %1518 = vrot.lane.b32.xlu0 %v1507, 36
      %v1519 = vpop.permute.xlu0 %1518
      %v1521 = vunpack.c.l.b16 %v379
      %v1522 = vpack.c.b16 %v1178, %v1521
      %v1524 = vshrl.u32 %v1522, 16
      %v1526 = vshll.u32 %v1522, 16
      %v1528 = vrot.slane %v1526, 1
      %v1529 = vor.u32 %v1524, %v1528
      %v1530 = vrot.slane %v1212, 1
      %v1531 = vsel %vm408, %v1529, %v1530
      %v1532 = vor.u32 %v1209, %v1530
      %v1533 = vrot.slane %v1221, 1
      %v1534 = vsel %vm408, %v1532, %v1533
      %v1535 = vor.u32 %v1218, %v1533
      %v1536 = vrot.slane %v1300, 1
      %v1537 = vsel %vm408, %v1535, %v1536
      %v1538 = vor.u32 %v1297, %v1536
      %v1539 = vrot.slane %v1481, 1
      %v1540 = vsel %vm408, %v1538, %v1539
      %v1541 = vor.u32 %v1478, %v1539
      %v1543 = vshll.u32 %v1507, 16
      %v1545 = vrot.slane %v1543, 1
      %v1546 = vsel %vm408, %v1541, %v1545
      %v1547 = vshrl.u32 %v1507, 16
      %v1549 = vor.u32 %v1547, %v1545
      %1550 = vrot.lane.b32.xlu0 %v1531, 40
      %v1551 = vpop.permute.xlu0 %1550
      %1552 = vrot.lane.b32.xlu0 %v1534, 40
      %v1553 = vpop.permute.xlu0 %1552
      %1554 = vrot.lane.b32.xlu0 %v1537, 40
      %v1555 = vpop.permute.xlu0 %1554
      %1556 = vrot.lane.b32.xlu0 %v1540, 40
      %v1557 = vpop.permute.xlu0 %1556
      %1558 = vrot.lane.b32.xlu0 %v1546, 40
      %v1559 = vpop.permute.xlu0 %1558
      %1560 = vrot.lane.b32.xlu0 %v1549, 40
      %v1561 = vpop.permute.xlu0 %1560
      %v1564 = vsel %vm957, %v933, %v1154
      %v1566 = vsel %vm957, %v726, %v1156
      %v1568 = vsel %vm957, %v727, %v1158
      %v1570 = vsel %vm957, %v741, %v1160
      %v1572 = vsel %vm957, %v934, %v1162
      %v1574 = vsel %vm957, %v1125, %v1164
      %v1576 = vsel %vm969, %v1564, %v1236
      %v1578 = vsel %vm969, %v1566, %v1238
      %v1580 = vsel %vm969, %v1568, %v1240
      %v1582 = vsel %vm969, %v1570, %v1242
      %v1584 = vsel %vm969, %v1572, %v1244
      %v1586 = vsel %vm969, %v1574, %v1246
      %v1588 = vsel %vm980, %v1576, %v1261
      %v1590 = vsel %vm980, %v1578, %v1263
      %v1592 = vsel %vm980, %v1580, %v1265
      %v1594 = vsel %vm980, %v1582, %v1267
      %v1596 = vsel %vm980, %v1584, %v1269
      %v1598 = vsel %vm980, %v1586, %v1271
      %v1600 = vsel %vm991, %v1588, %v1306
      %v1602 = vsel %vm991, %v1590, %v1308
      %v1604 = vsel %vm991, %v1592, %v1310
      %v1606 = vsel %vm991, %v1594, %v1312
      %v1608 = vsel %vm991, %v1596, %v1314
      %v1610 = vsel %vm991, %v1598, %v1316
      %v1612 = vsel %vm1002, %v1600, %v1371
      %v1614 = vsel %vm1002, %v1602, %v1373
      %v1616 = vsel %vm1002, %v1604, %v1375
      %v1618 = vsel %vm1002, %v1606, %v1377
      %v1620 = vsel %vm1002, %v1608, %v1379
      %v1622 = vsel %vm1002, %v1610, %v1381
      %v1624 = vsel %vm1013, %v1612, %v1398
      %v1626 = vsel %vm1013, %v1614, %v1400
      %v1628 = vsel %vm1013, %v1616, %v1402
      %v1630 = vsel %vm1013, %v1618, %v1404
      %v1632 = vsel %vm1013, %v1620, %v1406
      %v1634 = vsel %vm1013, %v1622, %v1408
      %v1636 = vsel %vm1024, %v1624, %v1441
      %v1638 = vsel %vm1024, %v1626, %v1443
      %v1640 = vsel %vm1024, %v1628, %v1445
      %v1642 = vsel %vm1024, %v1630, %v1447
      %v1644 = vsel %vm1024, %v1632, %v1449
      %v1646 = vsel %vm1024, %v1634, %v1451
      %v1648 = vsel %vm1035, %v1636, %v1494
      %v1650 = vsel %vm1035, %v1638, %v1496
      %v1652 = vsel %vm1035, %v1640, %v1498
      %v1654 = vsel %vm1035, %v1642, %v1500
      %v1656 = vsel %vm1035, %v1644, %v1502
      %v1658 = vsel %vm1035, %v1646, %v1504
      %v1660 = vsel %vm1046, %v1648, %v1509
      %v1662 = vsel %vm1046, %v1650, %v1511
      %v1664 = vsel %vm1046, %v1652, %v1513
      %v1666 = vsel %vm1046, %v1654, %v1515
      %v1668 = vsel %vm1046, %v1656, %v1517
      %v1670 = vsel %vm1046, %v1658, %v1519
      %v1672 = vsel %vm1057, %v1660, %v1551
      %v1674 = vsel %vm1057, %v1662, %v1553
      %v1676 = vsel %vm1057, %v1664, %v1555
      %v1678 = vsel %vm1057, %v1666, %v1557
      %v1680 = vsel %vm1057, %v1668, %v1559
      %v1682 = vsel %vm1057, %v1670, %v1561
      %v1683 = vshrl.u32 %v1672, 16
      %v1685 = vrot.slane %v1683, 2
      %v1686 = vshll.u32 %v1672, 16
      %v1688 = vrot.slane %v1686, 3
      %v1689 = vor.u32 %v1685, %v1688
      %v1690 = vshrl.u32 %v1674, 16
      %v1692 = vrot.slane %v1690, 2
      %v1693 = vshll.u32 %v1674, 16
      %v1695 = vrot.slane %v1693, 3
      %v1696 = vor.u32 %v1692, %v1695
      %v1697 = vsel %vm630, %v1689, %v1696
      %v1698 = vshrl.u32 %v1676, 16
      %v1700 = vrot.slane %v1698, 2
      %v1701 = vshll.u32 %v1676, 16
      %v1703 = vrot.slane %v1701, 3
      %v1704 = vor.u32 %v1700, %v1703
      %v1705 = vsel %vm630, %v1696, %v1704
      %v1706 = vshrl.u32 %v1678, 16
      %v1708 = vrot.slane %v1706, 2
      %v1709 = vshll.u32 %v1678, 16
      %v1711 = vrot.slane %v1709, 3
      %v1712 = vor.u32 %v1708, %v1711
      %v1713 = vsel %vm630, %v1704, %v1712
      %v1714 = vshrl.u32 %v1680, 16
      %v1716 = vrot.slane %v1714, 2
      %v1717 = vshll.u32 %v1680, 16
      %v1719 = vrot.slane %v1717, 3
      %v1720 = vor.u32 %v1716, %v1719
      %v1721 = vsel %vm630, %v1712, %v1720
      %v1722 = vshrl.u32 %v1682, 16
      %v1724 = vrot.slane %v1722, 2
      %v1725 = vshll.u32 %v1682, 16
      %v1727 = vrot.slane %v1725, 3
      %v1728 = vor.u32 %v1724, %v1727
      %v1729 = vsel %vm630, %v1720, %v1728
      %1730 = vrot.lane.b32.xlu0 %v1697, 64
      %v1731 = vpop.permute.xlu0 %1730
      %1732 = vrot.lane.b32.xlu0 %v1705, 64
      %v1733 = vpop.permute.xlu0 %1732
      %1734 = vrot.lane.b32.xlu0 %v1713, 64
      %v1735 = vpop.permute.xlu0 %1734
      %1736 = vrot.lane.b32.xlu0 %v1721, 64
      %v1737 = vpop.permute.xlu0 %1736
      %1738 = vrot.lane.b32.xlu0 %v1729, 64
      %v1739 = vpop.permute.xlu0 %1738
      %vm1740 = vcmask 523264
      %v1742 = vsel %vm1740, %v1114, %v1731
      %v1744 = vsel %vm1740, %v1116, %v1733
      %v1746 = vsel %vm1740, %v1118, %v1735
      %v1748 = vsel %vm1740, %v1120, %v1737
      %v1750 = vsel %vm1740, %v1122, %v1739
      %v1751 = vld [vmem:[%s3] sm:$0xf]
      %v1752 = vld [vmem:[%s3 + $0x4] sm:$0xf]
      %v1753 = vld [vmem:[%s3 + $0x8] sm:$0xf]
      %v1754 = vld [vmem:[%s3 + $0xc] sm:$0xf]
      %v1755 = vld [vmem:[%s3 + $0x10] sm:$0xf]
      %v1756 = vld [vmem:[%s3 + $0x14] sm:$0xf]
      %v1757 = vld [vmem:[%s3 + $0x18] sm:$0xf]
      %v1758 = vld [vmem:[%s3 + $0x1c] sm:$0xf]
      %v1759 = vld [vmem:[%s3 + $0x20] sm:$0xf]
      %v1760 = vld [vmem:[%s3 + $0x24] sm:$0xf]
      %v1761 = vld [vmem:[%s3 + $0x28] sm:$0xf]
      %v1762 = vld [vmem:[%s3 + $0x2c] sm:$0xf]
      %v1763 = vld [vmem:[%s3 + $0x30] sm:$0xf]
      %v1764 = vld [vmem:[%s3 + $0x34] sm:$0x3]
      %v1779 = vunpack.c.l.b16 %v1751
      %v1780 = vunpack.c.l.b16 %v1752
      %v1781 = vunpack.c.l.b16 %v1753
      %v1782 = vunpack.c.l.b16 %v1754
      %v1783 = vunpack.c.l.b16 %v1755
      %v1784 = vunpack.c.l.b16 %v1756
      %v1785 = vunpack.c.l.b16 %v1757
      %v1786 = vunpack.c.l.b16 %v1758
      %v1787 = vunpack.c.l.b16 %v1759
      %v1788 = vunpack.c.l.b16 %v1760
      %v1789 = vunpack.c.l.b16 %v1761
      %v1790 = vunpack.c.l.b16 %v1762
      %v1791 = vunpack.c.l.b16 %v1763
      %v1792 = vunpack.c.l.b16 %v1764
      %v1793 = vpack.c.b16 %v1780, %v1779
      %v1794 = vpack.c.b16 %v1782, %v1781
      %v1795 = vpack.c.b16 %v1784, %v1783
      %v1796 = vpack.c.b16 %v1786, %v1785
      %v1797 = vpack.c.b16 %v1788, %v1787
      %v1798 = vpack.c.b16 %v1790, %v1789
      %v1799 = vpack.c.b16 %v1792, %v1791
      %vm1806 = vcmask 883712
      %v1807 = vsel %vm1806, %v1742, 0
      %v1809 = vsel %vm1806, %v1744, 0
      %v1811 = vsel %vm1806, %v1746, 0
      %v1813 = vsel %vm1806, %v1748, 0
      %v1815 = vsel %vm1806, %v1750, 0
      %vm1817 = vcmask 1045504
      %v1819 = vsel %vm1817, %v1799, 0
      %1821 = vmatprep.subr.bf16.mxu0 0
      %1822 = vmatpush1.bf16.msra.mxu0 %v1793
      %1823 = vmatprep.subr.bf16.mxu0 0
      %1824 = vmatpush1.bf16.msra.mxu0 %v1794
      %1825 = vmatprep.subr.bf16.mxu0 0
      %1826 = vmatpush1.bf16.msra.mxu0 %v1795
      %1827 = vmatprep.subr.bf16.mxu0 0
      %1828 = vmatpush1.bf16.msra.mxu0 %v1796
      %1829 = vmatprep.subr.bf16.mxu0 0
      %1830 = vmatpush1.bf16.msra.mxu0 %v1797
      %1831 = vmatprep.subr.bf16.mxu0 0
      %1832 = vmatpush1.bf16.msra.mxu0 %v1798
      %1833 = vmatprep.subr.bf16.mxu0 0
      %1834 = vmatpush1.bf16.msra.mxu0 %v1819
      %1835 = vmatprep.subr.bf16.mxu0 0
      %1836 = vmatpush1.bf16.msra.mxu0 0
      %1837 = vmatprep.subr.bf16.mxu0 0
      %1838 = vmatpush1.bf16.msra.mxu0 0
      %1839 = vmatprep.subr.bf16.mxu0 0
      %1840 = vmatpush1.bf16.msra.mxu0 0
      %1841 = vmatprep.subr.bf16.mxu0 0
      %1842 = vmatpush1.bf16.msra.mxu0 0
      %1843 = vmatprep.subr.bf16.mxu0 0
      %1844 = vmatpush1.bf16.msra.mxu0 0
      %1845 = vmatprep.subr.bf16.mxu0 0
      %1846 = vmatpush1.bf16.msra.mxu0 0
      %1847 = vmatprep.subr.bf16.mxu0 0
      %1848 = vmatpush1.bf16.msra.mxu0 0
      %1849 = vmatprep.subr.bf16.mxu0 0
      %1850 = vmatpush1.bf16.msra.mxu0 0
      %1851 = vmatprep.subr.bf16.mxu0 0
      %1852 = vmatpush1.bf16.msra.mxu0 0
      %1853 = vmatprep.mubr.bf16.mxu0 0
      %1854 = vmatmul.mubr.bf16.gmra.mrb[0].mxu0 %v1807
      %v1855 = vpop.f32.mrb[0].mxu0
      %v1856 = vadd.f32 0.0, %v1855
      %v1857 = vpop.f32.mrb[0].mxu0
      %v1858 = vpop.f32.mrb[0].mxu0
      %v1859 = vadd.f32 0.0, %v1858
      %v1860 = vpop.f32.mrb[0].mxu0
      %1861 = vmatprep.mubr.bf16.mxu0 0
      %1862 = vmatmul.mubr.bf16.gmra.mrb[0].mxu0 %v1809
      %v1863 = vpop.f32.mrb[0].mxu0
      %v1864 = vadd.f32 0.0, %v1863
      %v1865 = vpop.f32.mrb[0].mxu0
      %v1866 = vpop.f32.mrb[0].mxu0
      %v1867 = vadd.f32 0.0, %v1866
      %v1868 = vpop.f32.mrb[0].mxu0
      %1869 = vmatprep.mubr.bf16.mxu0 0
      %1870 = vmatmul.mubr.bf16.gmra.mrb[0].mxu0 %v1811
      %v1871 = vpop.f32.mrb[0].mxu0
      %v1872 = vadd.f32 0.0, %v1871
      %v1873 = vpop.f32.mrb[0].mxu0
      %v1874 = vpop.f32.mrb[0].mxu0
      %v1875 = vadd.f32 0.0, %v1874
      %v1876 = vpop.f32.mrb[0].mxu0
      %1877 = vmatprep.mubr.bf16.mxu0 0
      %1878 = vmatmul.mubr.bf16.gmra.mrb[0].mxu0 %v1813
      %v1879 = vpop.f32.mrb[0].mxu0
      %v1880 = vadd.f32 0.0, %v1879
      %v1881 = vpop.f32.mrb[0].mxu0
      %v1882 = vpop.f32.mrb[0].mxu0
      %v1883 = vadd.f32 0.0, %v1882
      %v1884 = vpop.f32.mrb[0].mxu0
      %1885 = vmatprep.mubr.bf16.mxu0 0
      %1886 = vmatmul.mubr.bf16.gmra.mrb[0].mxu0 %v1815
      %v1887 = vpop.f32.mrb[0].mxu0
      %v1888 = vadd.f32 0.0, %v1887
      %v1889 = vpop.f32.mrb[0].mxu0
      %v1890 = vpop.f32.mrb[0].mxu0
      %v1891 = vadd.f32 0.0, %v1890
      %v1892 = vpop.f32.mrb[0].mxu0
      %1893 = vdwg.mxu0
      %v1894 = vpack.c.bf16 %v1859, %v1856
      %v1895 = vpack.c.bf16 %v1867, %v1864
      %v1896 = vpack.c.bf16 %v1875, %v1872
      %v1897 = vpack.c.bf16 %v1883, %v1880
      %v1898 = vpack.c.bf16 %v1891, %v1888
      %v1904 = vunpack.c.l.b16 %v1894
      %v1905 = vunpack.c.h.b16 %v1894
      %v1906 = vunpack.c.l.b16 %v1895
      %v1907 = vunpack.c.h.b16 %v1895
      %v1908 = vunpack.c.l.b16 %v1896
      %v1909 = vunpack.c.h.b16 %v1896
      %v1910 = vunpack.c.l.b16 %v1897
      %v1911 = vunpack.c.h.b16 %v1897
      %v1912 = vunpack.c.l.b16 %v1898
      %v1913 = vunpack.c.h.b16 %v1898
      %v1914 = vpack.c.b16 %v1904, %v1904
      %v1915 = vpack.c.b16 %v1905, %v1905
      %v1916 = vpack.c.b16 %v1906, %v1906
      %v1917 = vpack.c.b16 %v1907, %v1907
      %v1918 = vpack.c.b16 %v1908, %v1908
      %v1919 = vpack.c.b16 %v1909, %v1909
      %v1920 = vpack.c.b16 %v1910, %v1910
      %v1921 = vpack.c.b16 %v1911, %v1911
      %v1922 = vpack.c.b16 %v1912, %v1912
      %v1923 = vpack.c.b16 %v1913, %v1913
      %vm1934 = vcmask 125952
      %1935 = vst.msk [vmem:[%s315] sm:$0xf] %vm1934, %v1914
      %1936 = vst.msk [vmem:[%s315 + $0x4] sm:$0xf] %vm1934, %v1915
      %1937 = vst.msk [vmem:[%s315 + $0x8] sm:$0xf] %vm1934, %v1916
      %1938 = vst.msk [vmem:[%s315 + $0xc] sm:$0xf] %vm1934, %v1917
      %1939 = vst.msk [vmem:[%s315 + $0x10] sm:$0xf] %vm1934, %v1918
      %1940 = vst.msk [vmem:[%s315 + $0x14] sm:$0xf] %vm1934, %v1919
      %1941 = vst.msk [vmem:[%s315 + $0x18] sm:$0xf] %vm1934, %v1920
      %1942 = vst.msk [vmem:[%s315 + $0x1c] sm:$0xf] %vm1934, %v1921
      %1943 = vst.msk [vmem:[%s315 + $0x20] sm:$0xf] %vm1934, %v1922
      %vm1944 = vcmask 124928
      %1945 = vst.msk [vmem:[%s315 + $0x24] sm:$0x7] %vm1944, %v1923
      %p1946 = scmp.lt.s32.totalorder %s19, 1
      %s1947 = scalar_select %p1946, %s19, 1
      %p1948 = scmp.lt.s32.totalorder %s20, 7
      %s1949 = scalar_select %p1948, %s20, 7
      %s1950 = smul.addr %s1949, 10
      %s1951 = smul.addr %s1947, 80
      %s1952 = sadd.s32 %s1950, %s1951
      %s1953 = smul.addr %s1952, 4
      %s1954 = scalar_lea.vmem %s4, %s1953
      // Predicated region
      $region37: #{conv3d_pallas.1} parent=35 // pred_check
        %p1955 = pneg %p156
      $region38: #{conv3d_pallas.1} parent=35 // pred_check_branch
        %1957 = sbr.rel (%p1955) target = $region40
      $region39: #{conv3d_pallas.1} parent=35 // pred_region
        _
      $region40: #{conv3d_pallas.1} parent=35 // pred_fallthru
        _
    $region36: #{conv3d_pallas.1} parent=5 // pred_fallthru
      _
    %p1958 = scmp.le.s32.totalorder 2, %s10
    // Predicated region
    $region41: #{conv3d_pallas.1} parent=5 // pred_check
      %p1959 = pneg %p1958
    $region42: #{conv3d_pallas.1} parent=5 // pred_check_branch
      %1961 = sbr.rel (%p1959) target = $region44
    $region43: #{conv3d_pallas.1} parent=5 // pred_region
      %s1962 = ssub.s32 %s10, 2
      // Predicated region
      $region45: #{conv3d_pallas.1} parent=43 // pred_check
        %p1963 = pneg %p162
      $region46: #{conv3d_pallas.1} parent=43 // pred_check_branch
        %1965 = sbr.rel (%p1963) target = $region48
      $region47: #{conv3d_pallas.1} parent=43 // pred_region
        %p1966 = scmp.lt.s32.totalorder %s21, 1
        %s1967 = scalar_select %p1966, %s21, 1
        %p1968 = scmp.lt.s32.totalorder %s22, 7
        %s1969 = scalar_select %p1968, %s22, 7
        %s1970 = smul.addr %s1969, 10
        %s1971 = smul.addr %s1967, 80
        %s1972 = sadd.s32 %s1970, %s1971
        %s1973 = smul.addr %s1972, 4
        %s1974 = scalar_lea.vmem %s4, %s1973
      $region48: #{conv3d_pallas.1} parent=43 // pred_fallthru
        _
    $region44: #{conv3d_pallas.1} parent=5 // pred_fallthru
      _
  $region6: #{conv3d_pallas.1} parent=0 // loop_footer
    %s14 = sadd.s32 1, %s10
  $region7: #{conv3d_pallas.1} parent=0 // loop_footer_branch
    %9 = sbr.rel target = $region3
  $region8: #{conv3d_pallas.1} parent=0 // loop_exit
    _

</llo_original>
